<compile_context>
chip_gen: v7x
topology: tpu7x:2x2x1
jax: 0.10.0
libtpu: 0.0.40
codegen_flags: <defaults>
</compile_context>

<pallas_src>
import jax
import jax.numpy as jnp
from jax.experimental import pallas as pl
from jax.experimental.pallas import tpu as pltpu


def _round_up(x, m):
    return (x + m - 1) // m * m


def gru_chunk_kernel(x_ref, wih_ref, whh_ref, gib_ref, bhhn_ref, h0_ref,
                     out_ref, gi_scratch, h_scratch):
    """One (batch-shard, time-chunk) tile of the GRU.

    x_ref    : (T, Nb, Vp)   raw inputs for this chunk (time-major, zero-padded)
    wih_ref  : (Vp, 3Hp)     concatenated input-to-hidden weights (resident)
    whh_ref  : (Hp, 3Hp)     concatenated hidden-to-hidden weights (resident)
    gib_ref  : (1, 3Hp)      pre-summed biases (bih_r+bhh_r, bih_z+bhh_z, bih_n)
    bhhn_ref : (1, Hp)       hidden bias of the n gate (stays inside r*(...))
    h0_ref   : (Nb, Hp)      initial hidden state for this batch shard
    out_ref  : (T, Nb, Hp)   per-step hidden states for this chunk
    gi_scratch : (T, Nb, 3Hp) VMEM staging for the per-chunk input projection
    h_scratch  : (Nb, Hp)    recurrent state carried across time chunks
    """
    c = pl.program_id(1)                    # time-chunk index (sequential axis)

    @pl.when(c == 0)
    def _():
        h_scratch[...] = h0_ref[...]

    T, Nb, Hp = out_ref.shape
    Vp = x_ref.shape[2]

    # ---- Off the serial path: project the whole chunk through Wih in ONE
    # MXU call ((T*Nb, Vp) x (Vp, 3Hp)); result staged in VMEM scratch. ----
    x_flat = x_ref[...].reshape(T * Nb, Vp)
    gi_flat = jnp.dot(x_flat, wih_ref[...],
                      preferred_element_type=jnp.float32) + gib_ref[...]
    gi_scratch[...] = gi_flat.reshape(T, Nb, 3 * Hp)

    # ---- Sequential recurrence: only h_prev @ Whh_cat per step. ----
    whh = whh_ref[...]                                   # (Hp, 3Hp), f32 or bf16
    mm_dtype = whh.dtype
    bhh_n = jnp.broadcast_to(bhhn_ref[...], (Nb, Hp))    # hoisted broadcast
    h_init = h_scratch[...]

    def sigmoid(v):
        # sigma(x) = 0.5*tanh(x/2) + 0.5 : one EUP op, no divide.
        return 0.5 * jnp.tanh(0.5 * v) + 0.5

    def step(t, h_prev):
        gi = gi_scratch[t]                               # (Nb, 3Hp)
        gh = jnp.dot(h_prev.astype(mm_dtype), whh,
                     preferred_element_type=jnp.float32)  # (Nb, 3Hp), one MXU call
        r = sigmoid(gi[:, :Hp] + gh[:, :Hp])
        z = sigmoid(gi[:, Hp:2 * Hp] + gh[:, Hp:2 * Hp])
        n = jnp.tanh(gi[:, 2 * Hp:] + r * (gh[:, 2 * Hp:] + bhh_n))
        h = n + z * (h_prev - n)                         # == (1-z)*n + z*h_prev
        out_ref[t] = h.astype(out_ref.dtype)
        return h

    # Full unroll for short chunks; partial unroll otherwise (LLO visibility).
    unroll = True if T <= 16 else 8
    h_last = jax.lax.fori_loop(0, T, step, h_init, unroll=unroll)
    h_scratch[...] = h_last
    # TODO(synk): weight-stationary MXU driving (matmul_push_rhs/acc_lhs/pop)
    # could keep Whh resident in the systolic array across the T steps.


def encoder_forward(cx, params, *, time_chunk=32, recurrence_dtype=jnp.float32):
    """cx: (N, U, V) float input. Returns (encoder_hidden, encoder_outs)."""
    N, U, V = cx.shape
    H = params["h1_0"].shape[0]
    Hp = _round_up(H, 128)                    # lane-dense padded hidden size
    Vp = _round_up(V, 128)                    # lane-dense padded vocab size

    # Batch sharding across TensorCores only pays off on multi-TC chips with a
    # reasonably large batch; time must stay sequential either way.
    n_shards = 2 if N >= 16 else 1
    Np = _round_up(max(N, 1), 8 * n_shards)   # sublane-aligned padded batch
    Nb = Np // n_shards                       # per-shard batch block

    f32b = 4
    wbytes = jnp.dtype(recurrence_dtype).itemsize

    # ---- VMEM-budget-driven time chunk + scoped-VMEM limit (generation safe:
    # stays under v7x's 64 MiB and above v5e's 16 MiB default). ----
    resident = (Vp * 3 * Hp * f32b            # Wih_cat  (single-buffered)
                + Hp * 3 * Hp * wbytes        # Whh_cat  (single-buffered)
                + 4 * Hp * f32b               # biases
                + 3 * Nb * Hp * f32b)         # h0 (2 bufs) + h_scratch
    per_t = Nb * (2 * Vp + 5 * Hp) * f32b     # x(2x) + out(2x) + gi scratch
    budget = 24 * 1024 * 1024
    T = int(max(1, min(time_chunk, U, (budget - resident) // per_t)))
    U_pad = pl.cdiv(U, T) * T
    needed = resident + T * per_t
    vmem_limit = int(min(60 * 1024 * 1024,
                         max(32 * 1024 * 1024, int(needed * 1.5))))

    # ---- Inputs: pad the cheap V-wide tensor (no (U,N,3Hp) intermediate). ----
    x_t = jnp.transpose(cx.astype(jnp.float32), (1, 0, 2))            # (U, N, V)
    x_t = jnp.pad(x_t, ((0, U_pad - U), (0, Np - N), (0, Vp - V)))    # (U_pad, Np, Vp)

    wih, whh = params["wih"], params["whh"]               # (3, V, H), (3, H, H)
    bih, bhh = params["bih"], params["bhh"]               # (3, 1, H)

    def pad_cols(a):                                       # pad last dim H -> Hp
        return jnp.pad(a, [(0, 0)] * (a.ndim - 1) + [(0, Hp - H)])

    wih_cat = jnp.concatenate(
        [jnp.pad(wih[g], ((0, Vp - V), (0, Hp - H))) for g in range(3)], axis=-1)  # (Vp, 3Hp)
    whh_cat = jnp.concatenate(
        [jnp.pad(whh[g], ((0, Hp - H), (0, Hp - H))) for g in range(3)], axis=-1)  # (Hp, 3Hp)
    whh_cat = whh_cat.astype(recurrence_dtype)             # bf16 on v6e/v7x if desired

    # Pre-sum r/z biases; bhh_n must stay separate (inside r*(gh_n + bhh_n)).
    gi_bias = jnp.concatenate([pad_cols(bih[0] + bhh[0]),
                               pad_cols(bih[1] + bhh[1]),
                               pad_cols(bih[2])], axis=-1)              # (1, 3Hp)
    bhh_n = pad_cols(bhh[2])                                            # (1, Hp)

    h0 = jnp.broadcast_to(params["h1_0"].astype(jnp.float32), (N, H))
    h0 = jnp.pad(h0, ((0, Np - N), (0, Hp - H)))                        # (Np, Hp)

    resident_kw = dict(pipeline_mode=pl.Buffered(1))   # single-buffer invariants

    grid_spec = pltpu.PrefetchScalarGridSpec(
        num_scalar_prefetch=0,
        grid=(n_shards, U_pad // T),
        in_specs=[
            pl.BlockSpec((T, Nb, Vp), lambda b, c: (c, b, 0)),             # x chunk
            pl.BlockSpec((Vp, 3 * Hp), lambda b, c: (0, 0), **resident_kw),  # Wih_cat
            pl.BlockSpec((Hp, 3 * Hp), lambda b, c: (0, 0), **resident_kw),  # Whh_cat
            pl.BlockSpec((1, 3 * Hp), lambda b, c: (0, 0), **resident_kw),   # gi bias
            pl.BlockSpec((1, Hp), lambda b, c: (0, 0), **resident_kw),       # bhh_n
            pl.BlockSpec((Nb, Hp), lambda b, c: (b, 0)),                   # h0 (per shard)
        ],
        out_specs=pl.BlockSpec((T, Nb, Hp), lambda b, c: (c, b, 0)),       # lane-dense out
        scratch_shapes=[pltpu.VMEM((T, Nb, 3 * Hp), jnp.float32),          # gi staging
                        pltpu.VMEM((Nb, Hp), jnp.float32)],                # hidden carry
    )

    out = pl.pallas_call(
        gru_chunk_kernel,
        out_shape=jax.ShapeDtypeStruct((U_pad, Np, Hp), jnp.float32),
        grid_spec=grid_spec,
        compiler_params=pltpu.CompilerParams(
            dimension_semantics=("parallel", "arbitrary"),   # batch ∥, time sequential
            vmem_limit_bytes=vmem_limit),
    )(x_t, wih_cat, whh_cat, gi_bias, bhh_n, h0)

    encoder_outs = out[:U, :N, :H]                           # (U, N, H)
    # Final hidden == output at the last real time step (single-layer GRU).
    encoder_hidden = out[U - 1, :N, :H][None]                # (1, N, H)
    if N == 1:
        # PyTorch h1.squeeze(1) only squeezes when that dim is 1.
        encoder_hidden = encoder_hidden[:, 0, :]             # (1, H)
    return encoder_hidden, encoder_outs


def make_params(key, vocab_size, hidden_size):
    """Deterministic parameter init mirroring nn.GRU shapes (gate order r, z, n)."""
    k1, k2, k3, k4 = jax.random.split(key, 4)
    bound = 1.0 / jnp.sqrt(hidden_size)
    wih = jax.random.uniform(k1, (3, vocab_size, hidden_size),
                             minval=-bound, maxval=bound, dtype=jnp.float32)
    whh = jax.random.uniform(k2, (3, hidden_size, hidden_size),
                             minval=-bound, maxval=bound, dtype=jnp.float32)
    bih = jax.random.uniform(k3, (3, 1, hidden_size),
                             minval=-bound, maxval=bound, dtype=jnp.float32)
    bhh = jax.random.uniform(k4, (3, 1, hidden_size),
                             minval=-bound, maxval=bound, dtype=jnp.float32)
    # h1_0 is initialized to zeros in the PyTorch module (nn.Parameter(torch.zeros(H)))
    h1_0 = jnp.zeros((hidden_size,), jnp.float32)
    # TODO(synk): Wh1p, h2_0, h3_0, w_0 are declared in __init__ but unused in forward(); omitted.
    return {"wih": wih, "whh": whh, "bih": bih, "bhh": bhh, "h1_0": h1_0}


def encoder_forward_ref(cx, params):
    """Pure-JAX reference GRU (lax.scan) used only for a correctness check."""
    N, U, V = cx.shape
    x = jnp.transpose(cx.astype(jnp.float32), (1, 0, 2))
    h0 = jnp.broadcast_to(params["h1_0"], (N, params["h1_0"].shape[0])).astype(jnp.float32)
    wih, whh, bih, bhh = params["wih"], params["whh"], params["bih"], params["bhh"]
    hp = jax.lax.Precision.HIGHEST

    def step(h, xt):
        gi = [jnp.dot(xt, wih[g], precision=hp) + bih[g] for g in range(3)]
        gh = [jnp.dot(h, whh[g], precision=hp) + bhh[g] for g in range(3)]
        r = jax.nn.sigmoid(gi[0] + gh[0])
        z = jax.nn.sigmoid(gi[1] + gh[1])
        n = jnp.tanh(gi[2] + r * gh[2])
        h_new = (1.0 - z) * n + z * h
        return h_new, h_new

    h_last, outs = jax.lax.scan(step, h0, x)
    h_last = h_last[None]
    hidden = jnp.squeeze(h_last, axis=1) if N == 1 else h_last
    return hidden, outs


if __name__ == "__main__":
    # Small synthetic shapes consistent with the module's forward:
    # cx: (N, U, V) = (batch, seq, vocab). In the real module V = len(Phoneme43);
    # here a small synthetic vocab and hidden size are used.
    N, U, V, H = 2, 8, 16, 32

    key = jax.random.PRNGKey(0)
    k_param, k_data = jax.random.split(key)
    params = make_params(k_param, V, H)
    cx = jax.random.normal(k_data, (N, U, V), dtype=jnp.float32)

    ref_hidden, ref_outs = encoder_forward_ref(cx, params)

    # Exact-match path (f32 recurrence operands).
    encoder_hidden, encoder_outs = encoder_forward(cx, params)
    encoder_hidden = jax.block_until_ready(encoder_hidden)
    encoder_outs = jax.block_until_ready(encoder_outs)
    assert encoder_outs.shape == (U, N, H)
    assert encoder_hidden.shape == (1, N, H)
    assert jnp.allclose(encoder_outs, ref_outs, atol=2e-4, rtol=2e-4)
    assert jnp.allclose(encoder_hidden, ref_hidden, atol=2e-4, rtol=2e-4)

    # Fast path: bf16 MXU operands on the per-step recurrence matmul
    # (native on v6e/v7x; f32 accumulation + f32 gate math everywhere).
    fast_hidden, fast_outs = encoder_forward(cx, params,
                                             recurrence_dtype=jnp.bfloat16)
    fast_outs = jax.block_until_ready(fast_outs)
    assert fast_outs.shape == (U, N, H)
    assert bool(jnp.isfinite(fast_outs).all())
    assert jnp.allclose(fast_outs, ref_outs, atol=1e-1, rtol=1e-1)

    print("KERNEL_OK")
</pallas_src>

<mosaic_0001>
module attributes {stable_mosaic.version = 11 : i64} {
  func.func @gru_chunk_kernel(%arg0: i32, %arg1: i32, %arg2: memref<8x8x128xf32, #tpu.memory_space<vmem>>, %arg3: memref<128x384xf32, #tpu.memory_space<vmem>>, %arg4: memref<128x384xf32, #tpu.memory_space<vmem>>, %arg5: memref<1x384xf32, #tpu.memory_space<vmem>>, %arg6: memref<1x128xf32, #tpu.memory_space<vmem>>, %arg7: memref<8x128xf32, #tpu.memory_space<vmem>>, %arg8: memref<8x8x128xf32, #tpu.memory_space<vmem>>, %arg9: memref<8x8x384xf32, #tpu.memory_space<vmem>>, %arg10: memref<8x128xf32, #tpu.memory_space<vmem>>) attributes {dimension_semantics = [#tpu.dimension_semantics<parallel>, #tpu.dimension_semantics<arbitrary>], iteration_bounds = array<i64: 1, 1>, scalar_prefetch = 0 : i64, scratch_operands = 2 : i64, tpu.core_type = #tpu.core_type<tc>, window_params = [{transform_indices = @transform_0, window_bounds = array<i64: 8, 8, 128>}, {pipeline_mode = #tpu.pipeline_mode<synchronous>, transform_indices = @transform_1, window_bounds = array<i64: 128, 384>}, {pipeline_mode = #tpu.pipeline_mode<synchronous>, transform_indices = @transform_2, window_bounds = array<i64: 128, 384>}, {pipeline_mode = #tpu.pipeline_mode<synchronous>, transform_indices = @transform_3, window_bounds = array<i64: 1, 384>}, {pipeline_mode = #tpu.pipeline_mode<synchronous>, transform_indices = @transform_4, window_bounds = array<i64: 1, 128>}, {transform_indices = @transform_5, window_bounds = array<i64: 8, 128>}, {transform_indices = @transform_6, window_bounds = array<i64: 8, 8, 128>}]} {
    %c0_i32 = arith.constant 0 : i32
    %0 = arith.cmpi eq, %arg1, %c0_i32 : i32
    %1 = arith.extui %0 : i1 to i32
    %c0_i32_0 = arith.constant 0 : i32
    %2 = arith.cmpi ne, %1, %c0_i32_0 : i32
    scf.if %2 {
      %c0_107 = arith.constant 0 : index
      %c0_108 = arith.constant 0 : index
      %314 = vector.load %arg7[%c0_107, %c0_108] : memref<8x128xf32, #tpu.memory_space<vmem>>, vector<8x128xf32>
      %c0_109 = arith.constant 0 : index
      %c0_110 = arith.constant 0 : index
      %315 = vector.load %arg10[%c0_109, %c0_110] : memref<8x128xf32, #tpu.memory_space<vmem>>, vector<8x128xf32>
      tpu.vector_store %arg10[%c0_109, %c0_110], %314 {strides = array<i32>} : memref<8x128xf32, #tpu.memory_space<vmem>>, vector<8x128xf32>,
    } else {
    }
    %c0 = arith.constant 0 : index
    %c0_1 = arith.constant 0 : index
    %c0_2 = arith.constant 0 : index
    %3 = vector.load %arg2[%c0, %c0_1, %c0_2] : memref<8x8x128xf32, #tpu.memory_space<vmem>>, vector<8x8x128xf32>
    %4 = vector.shape_cast %3 : vector<8x8x128xf32> to vector<64x128xf32>
    %c0_3 = arith.constant 0 : index
    %c0_4 = arith.constant 0 : index
    %5 = vector.load %arg3[%c0_3, %c0_4] : memref<128x384xf32, #tpu.memory_space<vmem>>, vector<128x384xf32>
    %cst = arith.constant dense<0.000000e+00> : vector<64x384xf32>
    %6 = tpu.matmul %4, %5, %cst {dimension_numbers = #tpu.dot_dimension_numbers<[1], [0], [0], [1], [0, 0, 1, 1], [], []>} : vector<64x128xf32>, vector<128x384xf32>, vector<64x384xf32> -> vector<64x384xf32>
    %c0_5 = arith.constant 0 : index
    %c0_6 = arith.constant 0 : index
    %7 = vector.load %arg5[%c0_5, %c0_6] : memref<1x384xf32, #tpu.memory_space<vmem>>, vector<1x384xf32>
    %8 = vector.broadcast %7 : vector<1x384xf32> to vector<64x384xf32>
    %9 = arith.addf %6, %8 : vector<64x384xf32>
    %10 = vector.shape_cast %9 : vector<64x384xf32> to vector<8x8x384xf32>
    %c0_7 = arith.constant 0 : index
    %c0_8 = arith.constant 0 : index
    %c0_9 = arith.constant 0 : index
    %11 = vector.load %arg9[%c0_7, %c0_8, %c0_9] : memref<8x8x384xf32, #tpu.memory_space<vmem>>, vector<8x8x384xf32>
    tpu.vector_store %arg9[%c0_7, %c0_8, %c0_9], %10 {strides = array<i32>} : memref<8x8x384xf32, #tpu.memory_space<vmem>>, vector<8x8x384xf32>,
    %c0_10 = arith.constant 0 : index
    %c0_11 = arith.constant 0 : index
    %12 = vector.load %arg4[%c0_10, %c0_11] : memref<128x384xf32, #tpu.memory_space<vmem>>, vector<128x384xf32>
    %c0_12 = arith.constant 0 : index
    %c0_13 = arith.constant 0 : index
    %13 = vector.load %arg6[%c0_12, %c0_13] : memref<1x128xf32, #tpu.memory_space<vmem>>, vector<1x128xf32>
    %14 = vector.shape_cast %13 : vector<1x128xf32> to vector<1x128xf32>
    %15 = vector.broadcast %14 : vector<1x128xf32> to vector<8x128xf32>
    %c0_14 = arith.constant 0 : index
    %c0_15 = arith.constant 0 : index
    %16 = vector.load %arg10[%c0_14, %c0_15] : memref<8x128xf32, #tpu.memory_space<vmem>>, vector<8x128xf32>
    %c0_i32_16 = arith.constant 0 : i32
    %17 = arith.index_cast %c0_i32_16 : i32 to index
    %c0_17 = arith.constant 0 : index
    %c0_18 = arith.constant 0 : index
    %18 = vector.load %arg9[%17, %c0_17, %c0_18] : memref<8x8x384xf32, #tpu.memory_space<vmem>>, vector<1x8x384xf32>
    %19 = vector.shape_cast %18 : vector<1x8x384xf32> to vector<8x384xf32>
    %cst_19 = arith.constant dense<0.000000e+00> : vector<8x384xf32>
    %20 = tpu.matmul %16, %12, %cst_19 {dimension_numbers = #tpu.dot_dimension_numbers<[1], [0], [0], [1], [0, 0, 1, 1], [], []>} : vector<8x128xf32>, vector<128x384xf32>, vector<8x384xf32> -> vector<8x384xf32>
    %21 = vector.extract_strided_slice %19 {offsets = [0, 0], sizes = [8, 128], strides = [1, 1]} : vector<8x384xf32> to vector<8x128xf32>
    %22 = vector.extract_strided_slice %20 {offsets = [0, 0], sizes = [8, 128], strides = [1, 1]} : vector<8x384xf32> to vector<8x128xf32>
    %23 = arith.addf %21, %22 : vector<8x128xf32>
    %cst_20 = arith.constant 5.000000e-01 : f32
    %24 = vector.broadcast %cst_20 : f32 to vector<8x128xf32>
    %25 = arith.mulf %24, %23 : vector<8x128xf32>
    %26 = math.tanh %25 : vector<8x128xf32>
    %cst_21 = arith.constant 5.000000e-01 : f32
    %27 = vector.broadcast %cst_21 : f32 to vector<8x128xf32>
    %28 = arith.mulf %27, %26 : vector<8x128xf32>
    %cst_22 = arith.constant 5.000000e-01 : f32
    %29 = vector.broadcast %cst_22 : f32 to vector<8x128xf32>
    %30 = arith.addf %28, %29 : vector<8x128xf32>
    %31 = vector.extract_strided_slice %19 {offsets = [0, 128], sizes = [8, 128], strides = [1, 1]} : vector<8x384xf32> to vector<8x128xf32>
    %32 = vector.extract_strided_slice %20 {offsets = [0, 128], sizes = [8, 128], strides = [1, 1]} : vector<8x384xf32> to vector<8x128xf32>
    %33 = arith.addf %31, %32 : vector<8x128xf32>
    %cst_23 = arith.constant 5.000000e-01 : f32
    %34 = vector.broadcast %cst_23 : f32 to vector<8x128xf32>
    %35 = arith.mulf %34, %33 : vector<8x128xf32>
    %36 = math.tanh %35 : vector<8x128xf32>
    %cst_24 = arith.constant 5.000000e-01 : f32
    %37 = vector.broadcast %cst_24 : f32 to vector<8x128xf32>
    %38 = arith.mulf %37, %36 : vector<8x128xf32>
    %cst_25 = arith.constant 5.000000e-01 : f32
    %39 = vector.broadcast %cst_25 : f32 to vector<8x128xf32>
    %40 = arith.addf %38, %39 : vector<8x128xf32>
    %41 = vector.extract_strided_slice %19 {offsets = [0, 256], sizes = [8, 128], strides = [1, 1]} : vector<8x384xf32> to vector<8x128xf32>
    %42 = vector.extract_strided_slice %20 {offsets = [0, 256], sizes = [8, 128], strides = [1, 1]} : vector<8x384xf32> to vector<8x128xf32>
    %43 = arith.addf %42, %15 : vector<8x128xf32>
    %44 = arith.mulf %30, %43 : vector<8x128xf32>
    %45 = arith.addf %41, %44 : vector<8x128xf32>
    %46 = math.tanh %45 : vector<8x128xf32>
    %47 = arith.subf %16, %46 : vector<8x128xf32>
    %48 = arith.mulf %40, %47 : vector<8x128xf32>
    %49 = arith.addf %46, %48 : vector<8x128xf32>
    %50 = arith.index_cast %c0_i32_16 : i32 to index
    %c0_26 = arith.constant 0 : index
    %c0_27 = arith.constant 0 : index
    %51 = vector.load %arg8[%50, %c0_26, %c0_27] : memref<8x8x128xf32, #tpu.memory_space<vmem>>, vector<1x8x128xf32>
    %52 = vector.shape_cast %51 : vector<1x8x128xf32> to vector<8x128xf32>
    %53 = vector.shape_cast %49 : vector<8x128xf32> to vector<1x8x128xf32>
    tpu.vector_store %arg8[%50, %c0_26, %c0_27], %53 {strides = array<i32>} : memref<8x8x128xf32, #tpu.memory_space<vmem>>, vector<1x8x128xf32>,
    %c1_i32 = arith.constant 1 : i32
    %54 = arith.index_cast %c1_i32 : i32 to index
    %c0_28 = arith.constant 0 : index
    %c0_29 = arith.constant 0 : index
    %55 = vector.load %arg9[%54, %c0_28, %c0_29] : memref<8x8x384xf32, #tpu.memory_space<vmem>>, vector<1x8x384xf32>
    %56 = vector.shape_cast %55 : vector<1x8x384xf32> to vector<8x384xf32>
    %cst_30 = arith.constant dense<0.000000e+00> : vector<8x384xf32>
    %57 = tpu.matmul %49, %12, %cst_30 {dimension_numbers = #tpu.dot_dimension_numbers<[1], [0], [0], [1], [0, 0, 1, 1], [], []>} : vector<8x128xf32>, vector<128x384xf32>, vector<8x384xf32> -> vector<8x384xf32>
    %58 = vector.extract_strided_slice %56 {offsets = [0, 0], sizes = [8, 128], strides = [1, 1]} : vector<8x384xf32> to vector<8x128xf32>
    %59 = vector.extract_strided_slice %57 {offsets = [0, 0], sizes = [8, 128], strides = [1, 1]} : vector<8x384xf32> to vector<8x128xf32>
    %60 = arith.addf %58, %59 : vector<8x128xf32>
    %cst_31 = arith.constant 5.000000e-01 : f32
    %61 = vector.broadcast %cst_31 : f32 to vector<8x128xf32>
    %62 = arith.mulf %61, %60 : vector<8x128xf32>
    %63 = math.tanh %62 : vector<8x128xf32>
    %cst_32 = arith.constant 5.000000e-01 : f32
    %64 = vector.broadcast %cst_32 : f32 to vector<8x128xf32>
    %65 = arith.mulf %64, %63 : vector<8x128xf32>
    %cst_33 = arith.constant 5.000000e-01 : f32
    %66 = vector.broadcast %cst_33 : f32 to vector<8x128xf32>
    %67 = arith.addf %65, %66 : vector<8x128xf32>
    %68 = vector.extract_strided_slice %56 {offsets = [0, 128], sizes = [8, 128], strides = [1, 1]} : vector<8x384xf32> to vector<8x128xf32>
    %69 = vector.extract_strided_slice %57 {offsets = [0, 128], sizes = [8, 128], strides = [1, 1]} : vector<8x384xf32> to vector<8x128xf32>
    %70 = arith.addf %68, %69 : vector<8x128xf32>
    %cst_34 = arith.constant 5.000000e-01 : f32
    %71 = vector.broadcast %cst_34 : f32 to vector<8x128xf32>
    %72 = arith.mulf %71, %70 : vector<8x128xf32>
    %73 = math.tanh %72 : vector<8x128xf32>
    %cst_35 = arith.constant 5.000000e-01 : f32
    %74 = vector.broadcast %cst_35 : f32 to vector<8x128xf32>
    %75 = arith.mulf %74, %73 : vector<8x128xf32>
    %cst_36 = arith.constant 5.000000e-01 : f32
    %76 = vector.broadcast %cst_36 : f32 to vector<8x128xf32>
    %77 = arith.addf %75, %76 : vector<8x128xf32>
    %78 = vector.extract_strided_slice %56 {offsets = [0, 256], sizes = [8, 128], strides = [1, 1]} : vector<8x384xf32> to vector<8x128xf32>
    %79 = vector.extract_strided_slice %57 {offsets = [0, 256], sizes = [8, 128], strides = [1, 1]} : vector<8x384xf32> to vector<8x128xf32>
    %80 = arith.addf %79, %15 : vector<8x128xf32>
    %81 = arith.mulf %67, %80 : vector<8x128xf32>
    %82 = arith.addf %78, %81 : vector<8x128xf32>
    %83 = math.tanh %82 : vector<8x128xf32>
    %84 = arith.subf %49, %83 : vector<8x128xf32>
    %85 = arith.mulf %77, %84 : vector<8x128xf32>
    %86 = arith.addf %83, %85 : vector<8x128xf32>
    %87 = arith.index_cast %c1_i32 : i32 to index
    %c0_37 = arith.constant 0 : index
    %c0_38 = arith.constant 0 : index
    %88 = vector.load %arg8[%87, %c0_37, %c0_38] : memref<8x8x128xf32, #tpu.memory_space<vmem>>, vector<1x8x128xf32>
    %89 = vector.shape_cast %88 : vector<1x8x128xf32> to vector<8x128xf32>
    %90 = vector.shape_cast %86 : vector<8x128xf32> to vector<1x8x128xf32>
    tpu.vector_store %arg8[%87, %c0_37, %c0_38], %90 {strides = array<i32>} : memref<8x8x128xf32, #tpu.memory_space<vmem>>, vector<1x8x128xf32>,
    %c2_i32 = arith.constant 2 : i32
    %91 = arith.index_cast %c2_i32 : i32 to index
    %c0_39 = arith.constant 0 : index
    %c0_40 = arith.constant 0 : index
    %92 = vector.load %arg9[%91, %c0_39, %c0_40] : memref<8x8x384xf32, #tpu.memory_space<vmem>>, vector<1x8x384xf32>
    %93 = vector.shape_cast %92 : vector<1x8x384xf32> to vector<8x384xf32>
    %cst_41 = arith.constant dense<0.000000e+00> : vector<8x384xf32>
    %94 = tpu.matmul %86, %12, %cst_41 {dimension_numbers = #tpu.dot_dimension_numbers<[1], [0], [0], [1], [0, 0, 1, 1], [], []>} : vector<8x128xf32>, vector<128x384xf32>, vector<8x384xf32> -> vector<8x384xf32>
    %95 = vector.extract_strided_slice %93 {offsets = [0, 0], sizes = [8, 128], strides = [1, 1]} : vector<8x384xf32> to vector<8x128xf32>
    %96 = vector.extract_strided_slice %94 {offsets = [0, 0], sizes = [8, 128], strides = [1, 1]} : vector<8x384xf32> to vector<8x128xf32>
    %97 = arith.addf %95, %96 : vector<8x128xf32>
    %cst_42 = arith.constant 5.000000e-01 : f32
    %98 = vector.broadcast %cst_42 : f32 to vector<8x128xf32>
    %99 = arith.mulf %98, %97 : vector<8x128xf32>
    %100 = math.tanh %99 : vector<8x128xf32>
    %cst_43 = arith.constant 5.000000e-01 : f32
    %101 = vector.broadcast %cst_43 : f32 to vector<8x128xf32>
    %102 = arith.mulf %101, %100 : vector<8x128xf32>
    %cst_44 = arith.constant 5.000000e-01 : f32
    %103 = vector.broadcast %cst_44 : f32 to vector<8x128xf32>
    %104 = arith.addf %102, %103 : vector<8x128xf32>
    %105 = vector.extract_strided_slice %93 {offsets = [0, 128], sizes = [8, 128], strides = [1, 1]} : vector<8x384xf32> to vector<8x128xf32>
    %106 = vector.extract_strided_slice %94 {offsets = [0, 128], sizes = [8, 128], strides = [1, 1]} : vector<8x384xf32> to vector<8x128xf32>
    %107 = arith.addf %105, %106 : vector<8x128xf32>
    %cst_45 = arith.constant 5.000000e-01 : f32
    %108 = vector.broadcast %cst_45 : f32 to vector<8x128xf32>
    %109 = arith.mulf %108, %107 : vector<8x128xf32>
    %110 = math.tanh %109 : vector<8x128xf32>
    %cst_46 = arith.constant 5.000000e-01 : f32
    %111 = vector.broadcast %cst_46 : f32 to vector<8x128xf32>
    %112 = arith.mulf %111, %110 : vector<8x128xf32>
    %cst_47 = arith.constant 5.000000e-01 : f32
    %113 = vector.broadcast %cst_47 : f32 to vector<8x128xf32>
    %114 = arith.addf %112, %113 : vector<8x128xf32>
    %115 = vector.extract_strided_slice %93 {offsets = [0, 256], sizes = [8, 128], strides = [1, 1]} : vector<8x384xf32> to vector<8x128xf32>
    %116 = vector.extract_strided_slice %94 {offsets = [0, 256], sizes = [8, 128], strides = [1, 1]} : vector<8x384xf32> to vector<8x128xf32>
    %117 = arith.addf %116, %15 : vector<8x128xf32>
    %118 = arith.mulf %104, %117 : vector<8x128xf32>
    %119 = arith.addf %115, %118 : vector<8x128xf32>
    %120 = math.tanh %119 : vector<8x128xf32>
    %121 = arith.subf %86, %120 : vector<8x128xf32>
    %122 = arith.mulf %114, %121 : vector<8x128xf32>
    %123 = arith.addf %120, %122 : vector<8x128xf32>
    %124 = arith.index_cast %c2_i32 : i32 to index
    %c0_48 = arith.constant 0 : index
    %c0_49 = arith.constant 0 : index
    %125 = vector.load %arg8[%124, %c0_48, %c0_49] : memref<8x8x128xf32, #tpu.memory_space<vmem>>, vector<1x8x128xf32>
    %126 = vector.shape_cast %125 : vector<1x8x128xf32> to vector<8x128xf32>
    %127 = vector.shape_cast %123 : vector<8x128xf32> to vector<1x8x128xf32>
    tpu.vector_store %arg8[%124, %c0_48, %c0_49], %127 {strides = array<i32>} : memref<8x8x128xf32, #tpu.memory_space<vmem>>, vector<1x8x128xf32>,
    %c3_i32 = arith.constant 3 : i32
    %128 = arith.index_cast %c3_i32 : i32 to index
    %c0_50 = arith.constant 0 : index
    %c0_51 = arith.constant 0 : index
    %129 = vector.load %arg9[%128, %c0_50, %c0_51] : memref<8x8x384xf32, #tpu.memory_space<vmem>>, vector<1x8x384xf32>
    %130 = vector.shape_cast %129 : vector<1x8x384xf32> to vector<8x384xf32>
    %cst_52 = arith.constant dense<0.000000e+00> : vector<8x384xf32>
    %131 = tpu.matmul %123, %12, %cst_52 {dimension_numbers = #tpu.dot_dimension_numbers<[1], [0], [0], [1], [0, 0, 1, 1], [], []>} : vector<8x128xf32>, vector<128x384xf32>, vector<8x384xf32> -> vector<8x384xf32>
    %132 = vector.extract_strided_slice %130 {offsets = [0, 0], sizes = [8, 128], strides = [1, 1]} : vector<8x384xf32> to vector<8x128xf32>
    %133 = vector.extract_strided_slice %131 {offsets = [0, 0], sizes = [8, 128], strides = [1, 1]} : vector<8x384xf32> to vector<8x128xf32>
    %134 = arith.addf %132, %133 : vector<8x128xf32>
    %cst_53 = arith.constant 5.000000e-01 : f32
    %135 = vector.broadcast %cst_53 : f32 to vector<8x128xf32>
    %136 = arith.mulf %135, %134 : vector<8x128xf32>
    %137 = math.tanh %136 : vector<8x128xf32>
    %cst_54 = arith.constant 5.000000e-01 : f32
    %138 = vector.broadcast %cst_54 : f32 to vector<8x128xf32>
    %139 = arith.mulf %138, %137 : vector<8x128xf32>
    %cst_55 = arith.constant 5.000000e-01 : f32
    %140 = vector.broadcast %cst_55 : f32 to vector<8x128xf32>
    %141 = arith.addf %139, %140 : vector<8x128xf32>
    %142 = vector.extract_strided_slice %130 {offsets = [0, 128], sizes = [8, 128], strides = [1, 1]} : vector<8x384xf32> to vector<8x128xf32>
    %143 = vector.extract_strided_slice %131 {offsets = [0, 128], sizes = [8, 128], strides = [1, 1]} : vector<8x384xf32> to vector<8x128xf32>
    %144 = arith.addf %142, %143 : vector<8x128xf32>
    %cst_56 = arith.constant 5.000000e-01 : f32
    %145 = vector.broadcast %cst_56 : f32 to vector<8x128xf32>
    %146 = arith.mulf %145, %144 : vector<8x128xf32>
    %147 = math.tanh %146 : vector<8x128xf32>
    %cst_57 = arith.constant 5.000000e-01 : f32
    %148 = vector.broadcast %cst_57 : f32 to vector<8x128xf32>
    %149 = arith.mulf %148, %147 : vector<8x128xf32>
    %cst_58 = arith.constant 5.000000e-01 : f32
    %150 = vector.broadcast %cst_58 : f32 to vector<8x128xf32>
    %151 = arith.addf %149, %150 : vector<8x128xf32>
    %152 = vector.extract_strided_slice %130 {offsets = [0, 256], sizes = [8, 128], strides = [1, 1]} : vector<8x384xf32> to vector<8x128xf32>
    %153 = vector.extract_strided_slice %131 {offsets = [0, 256], sizes = [8, 128], strides = [1, 1]} : vector<8x384xf32> to vector<8x128xf32>
    %154 = arith.addf %153, %15 : vector<8x128xf32>
    %155 = arith.mulf %141, %154 : vector<8x128xf32>
    %156 = arith.addf %152, %155 : vector<8x128xf32>
    %157 = math.tanh %156 : vector<8x128xf32>
    %158 = arith.subf %123, %157 : vector<8x128xf32>
    %159 = arith.mulf %151, %158 : vector<8x128xf32>
    %160 = arith.addf %157, %159 : vector<8x128xf32>
    %161 = arith.index_cast %c3_i32 : i32 to index
    %c0_59 = arith.constant 0 : index
    %c0_60 = arith.constant 0 : index
    %162 = vector.load %arg8[%161, %c0_59, %c0_60] : memref<8x8x128xf32, #tpu.memory_space<vmem>>, vector<1x8x128xf32>
    %163 = vector.shape_cast %162 : vector<1x8x128xf32> to vector<8x128xf32>
    %164 = vector.shape_cast %160 : vector<8x128xf32> to vector<1x8x128xf32>
    tpu.vector_store %arg8[%161, %c0_59, %c0_60], %164 {strides = array<i32>} : memref<8x8x128xf32, #tpu.memory_space<vmem>>, vector<1x8x128xf32>,
    %c4_i32 = arith.constant 4 : i32
    %165 = arith.index_cast %c4_i32 : i32 to index
    %c0_61 = arith.constant 0 : index
    %c0_62 = arith.constant 0 : index
    %166 = vector.load %arg9[%165, %c0_61, %c0_62] : memref<8x8x384xf32, #tpu.memory_space<vmem>>, vector<1x8x384xf32>
    %167 = vector.shape_cast %166 : vector<1x8x384xf32> to vector<8x384xf32>
    %cst_63 = arith.constant dense<0.000000e+00> : vector<8x384xf32>
    %168 = tpu.matmul %160, %12, %cst_63 {dimension_numbers = #tpu.dot_dimension_numbers<[1], [0], [0], [1], [0, 0, 1, 1], [], []>} : vector<8x128xf32>, vector<128x384xf32>, vector<8x384xf32> -> vector<8x384xf32>
    %169 = vector.extract_strided_slice %167 {offsets = [0, 0], sizes = [8, 128], strides = [1, 1]} : vector<8x384xf32> to vector<8x128xf32>
    %170 = vector.extract_strided_slice %168 {offsets = [0, 0], sizes = [8, 128], strides = [1, 1]} : vector<8x384xf32> to vector<8x128xf32>
    %171 = arith.addf %169, %170 : vector<8x128xf32>
    %cst_64 = arith.constant 5.000000e-01 : f32
    %172 = vector.broadcast %cst_64 : f32 to vector<8x128xf32>
    %173 = arith.mulf %172, %171 : vector<8x128xf32>
    %174 = math.tanh %173 : vector<8x128xf32>
    %cst_65 = arith.constant 5.000000e-01 : f32
    %175 = vector.broadcast %cst_65 : f32 to vector<8x128xf32>
    %176 = arith.mulf %175, %174 : vector<8x128xf32>
    %cst_66 = arith.constant 5.000000e-01 : f32
    %177 = vector.broadcast %cst_66 : f32 to vector<8x128xf32>
    %178 = arith.addf %176, %177 : vector<8x128xf32>
    %179 = vector.extract_strided_slice %167 {offsets = [0, 128], sizes = [8, 128], strides = [1, 1]} : vector<8x384xf32> to vector<8x128xf32>
    %180 = vector.extract_strided_slice %168 {offsets = [0, 128], sizes = [8, 128], strides = [1, 1]} : vector<8x384xf32> to vector<8x128xf32>
    %181 = arith.addf %179, %180 : vector<8x128xf32>
    %cst_67 = arith.constant 5.000000e-01 : f32
    %182 = vector.broadcast %cst_67 : f32 to vector<8x128xf32>
    %183 = arith.mulf %182, %181 : vector<8x128xf32>
    %184 = math.tanh %183 : vector<8x128xf32>
    %cst_68 = arith.constant 5.000000e-01 : f32
    %185 = vector.broadcast %cst_68 : f32 to vector<8x128xf32>
    %186 = arith.mulf %185, %184 : vector<8x128xf32>
    %cst_69 = arith.constant 5.000000e-01 : f32
    %187 = vector.broadcast %cst_69 : f32 to vector<8x128xf32>
    %188 = arith.addf %186, %187 : vector<8x128xf32>
    %189 = vector.extract_strided_slice %167 {offsets = [0, 256], sizes = [8, 128], strides = [1, 1]} : vector<8x384xf32> to vector<8x128xf32>
    %190 = vector.extract_strided_slice %168 {offsets = [0, 256], sizes = [8, 128], strides = [1, 1]} : vector<8x384xf32> to vector<8x128xf32>
    %191 = arith.addf %190, %15 : vector<8x128xf32>
    %192 = arith.mulf %178, %191 : vector<8x128xf32>
    %193 = arith.addf %189, %192 : vector<8x128xf32>
    %194 = math.tanh %193 : vector<8x128xf32>
    %195 = arith.subf %160, %194 : vector<8x128xf32>
    %196 = arith.mulf %188, %195 : vector<8x128xf32>
    %197 = arith.addf %194, %196 : vector<8x128xf32>
    %198 = arith.index_cast %c4_i32 : i32 to index
    %c0_70 = arith.constant 0 : index
    %c0_71 = arith.constant 0 : index
    %199 = vector.load %arg8[%198, %c0_70, %c0_71] : memref<8x8x128xf32, #tpu.memory_space<vmem>>, vector<1x8x128xf32>
    %200 = vector.shape_cast %199 : vector<1x8x128xf32> to vector<8x128xf32>
    %201 = vector.shape_cast %197 : vector<8x128xf32> to vector<1x8x128xf32>
    tpu.vector_store %arg8[%198, %c0_70, %c0_71], %201 {strides = array<i32>} : memref<8x8x128xf32, #tpu.memory_space<vmem>>, vector<1x8x128xf32>,
    %c5_i32 = arith.constant 5 : i32
    %202 = arith.index_cast %c5_i32 : i32 to index
    %c0_72 = arith.constant 0 : index
    %c0_73 = arith.constant 0 : index
    %203 = vector.load %arg9[%202, %c0_72, %c0_73] : memref<8x8x384xf32, #tpu.memory_space<vmem>>, vector<1x8x384xf32>
    %204 = vector.shape_cast %203 : vector<1x8x384xf32> to vector<8x384xf32>
    %cst_74 = arith.constant dense<0.000000e+00> : vector<8x384xf32>
    %205 = tpu.matmul %197, %12, %cst_74 {dimension_numbers = #tpu.dot_dimension_numbers<[1], [0], [0], [1], [0, 0, 1, 1], [], []>} : vector<8x128xf32>, vector<128x384xf32>, vector<8x384xf32> -> vector<8x384xf32>
    %206 = vector.extract_strided_slice %204 {offsets = [0, 0], sizes = [8, 128], strides = [1, 1]} : vector<8x384xf32> to vector<8x128xf32>
    %207 = vector.extract_strided_slice %205 {offsets = [0, 0], sizes = [8, 128], strides = [1, 1]} : vector<8x384xf32> to vector<8x128xf32>
    %208 = arith.addf %206, %207 : vector<8x128xf32>
    %cst_75 = arith.constant 5.000000e-01 : f32
    %209 = vector.broadcast %cst_75 : f32 to vector<8x128xf32>
    %210 = arith.mulf %209, %208 : vector<8x128xf32>
    %211 = math.tanh %210 : vector<8x128xf32>
    %cst_76 = arith.constant 5.000000e-01 : f32
    %212 = vector.broadcast %cst_76 : f32 to vector<8x128xf32>
    %213 = arith.mulf %212, %211 : vector<8x128xf32>
    %cst_77 = arith.constant 5.000000e-01 : f32
    %214 = vector.broadcast %cst_77 : f32 to vector<8x128xf32>
    %215 = arith.addf %213, %214 : vector<8x128xf32>
    %216 = vector.extract_strided_slice %204 {offsets = [0, 128], sizes = [8, 128], strides = [1, 1]} : vector<8x384xf32> to vector<8x128xf32>
    %217 = vector.extract_strided_slice %205 {offsets = [0, 128], sizes = [8, 128], strides = [1, 1]} : vector<8x384xf32> to vector<8x128xf32>
    %218 = arith.addf %216, %217 : vector<8x128xf32>
    %cst_78 = arith.constant 5.000000e-01 : f32
    %219 = vector.broadcast %cst_78 : f32 to vector<8x128xf32>
    %220 = arith.mulf %219, %218 : vector<8x128xf32>
    %221 = math.tanh %220 : vector<8x128xf32>
    %cst_79 = arith.constant 5.000000e-01 : f32
    %222 = vector.broadcast %cst_79 : f32 to vector<8x128xf32>
    %223 = arith.mulf %222, %221 : vector<8x128xf32>
    %cst_80 = arith.constant 5.000000e-01 : f32
    %224 = vector.broadcast %cst_80 : f32 to vector<8x128xf32>
    %225 = arith.addf %223, %224 : vector<8x128xf32>
    %226 = vector.extract_strided_slice %204 {offsets = [0, 256], sizes = [8, 128], strides = [1, 1]} : vector<8x384xf32> to vector<8x128xf32>
    %227 = vector.extract_strided_slice %205 {offsets = [0, 256], sizes = [8, 128], strides = [1, 1]} : vector<8x384xf32> to vector<8x128xf32>
    %228 = arith.addf %227, %15 : vector<8x128xf32>
    %229 = arith.mulf %215, %228 : vector<8x128xf32>
    %230 = arith.addf %226, %229 : vector<8x128xf32>
    %231 = math.tanh %230 : vector<8x128xf32>
    %232 = arith.subf %197, %231 : vector<8x128xf32>
    %233 = arith.mulf %225, %232 : vector<8x128xf32>
    %234 = arith.addf %231, %233 : vector<8x128xf32>
    %235 = arith.index_cast %c5_i32 : i32 to index
    %c0_81 = arith.constant 0 : index
    %c0_82 = arith.constant 0 : index
    %236 = vector.load %arg8[%235, %c0_81, %c0_82] : memref<8x8x128xf32, #tpu.memory_space<vmem>>, vector<1x8x128xf32>
    %237 = vector.shape_cast %236 : vector<1x8x128xf32> to vector<8x128xf32>
    %238 = vector.shape_cast %234 : vector<8x128xf32> to vector<1x8x128xf32>
    tpu.vector_store %arg8[%235, %c0_81, %c0_82], %238 {strides = array<i32>} : memref<8x8x128xf32, #tpu.memory_space<vmem>>, vector<1x8x128xf32>,
    %c6_i32 = arith.constant 6 : i32
    %239 = arith.index_cast %c6_i32 : i32 to index
    %c0_83 = arith.constant 0 : index
    %c0_84 = arith.constant 0 : index
    %240 = vector.load %arg9[%239, %c0_83, %c0_84] : memref<8x8x384xf32, #tpu.memory_space<vmem>>, vector<1x8x384xf32>
    %241 = vector.shape_cast %240 : vector<1x8x384xf32> to vector<8x384xf32>
    %cst_85 = arith.constant dense<0.000000e+00> : vector<8x384xf32>
    %242 = tpu.matmul %234, %12, %cst_85 {dimension_numbers = #tpu.dot_dimension_numbers<[1], [0], [0], [1], [0, 0, 1, 1], [], []>} : vector<8x128xf32>, vector<128x384xf32>, vector<8x384xf32> -> vector<8x384xf32>
    %243 = vector.extract_strided_slice %241 {offsets = [0, 0], sizes = [8, 128], strides = [1, 1]} : vector<8x384xf32> to vector<8x128xf32>
    %244 = vector.extract_strided_slice %242 {offsets = [0, 0], sizes = [8, 128], strides = [1, 1]} : vector<8x384xf32> to vector<8x128xf32>
    %245 = arith.addf %243, %244 : vector<8x128xf32>
    %cst_86 = arith.constant 5.000000e-01 : f32
    %246 = vector.broadcast %cst_86 : f32 to vector<8x128xf32>
    %247 = arith.mulf %246, %245 : vector<8x128xf32>
    %248 = math.tanh %247 : vector<8x128xf32>
    %cst_87 = arith.constant 5.000000e-01 : f32
    %249 = vector.broadcast %cst_87 : f32 to vector<8x128xf32>
    %250 = arith.mulf %249, %248 : vector<8x128xf32>
    %cst_88 = arith.constant 5.000000e-01 : f32
    %251 = vector.broadcast %cst_88 : f32 to vector<8x128xf32>
    %252 = arith.addf %250, %251 : vector<8x128xf32>
    %253 = vector.extract_strided_slice %241 {offsets = [0, 128], sizes = [8, 128], strides = [1, 1]} : vector<8x384xf32> to vector<8x128xf32>
    %254 = vector.extract_strided_slice %242 {offsets = [0, 128], sizes = [8, 128], strides = [1, 1]} : vector<8x384xf32> to vector<8x128xf32>
    %255 = arith.addf %253, %254 : vector<8x128xf32>
    %cst_89 = arith.constant 5.000000e-01 : f32
    %256 = vector.broadcast %cst_89 : f32 to vector<8x128xf32>
    %257 = arith.mulf %256, %255 : vector<8x128xf32>
    %258 = math.tanh %257 : vector<8x128xf32>
    %cst_90 = arith.constant 5.000000e-01 : f32
    %259 = vector.broadcast %cst_90 : f32 to vector<8x128xf32>
    %260 = arith.mulf %259, %258 : vector<8x128xf32>
    %cst_91 = arith.constant 5.000000e-01 : f32
    %261 = vector.broadcast %cst_91 : f32 to vector<8x128xf32>
    %262 = arith.addf %260, %261 : vector<8x128xf32>
    %263 = vector.extract_strided_slice %241 {offsets = [0, 256], sizes = [8, 128], strides = [1, 1]} : vector<8x384xf32> to vector<8x128xf32>
    %264 = vector.extract_strided_slice %242 {offsets = [0, 256], sizes = [8, 128], strides = [1, 1]} : vector<8x384xf32> to vector<8x128xf32>
    %265 = arith.addf %264, %15 : vector<8x128xf32>
    %266 = arith.mulf %252, %265 : vector<8x128xf32>
    %267 = arith.addf %263, %266 : vector<8x128xf32>
    %268 = math.tanh %267 : vector<8x128xf32>
    %269 = arith.subf %234, %268 : vector<8x128xf32>
    %270 = arith.mulf %262, %269 : vector<8x128xf32>
    %271 = arith.addf %268, %270 : vector<8x128xf32>
    %272 = arith.index_cast %c6_i32 : i32 to index
    %c0_92 = arith.constant 0 : index
    %c0_93 = arith.constant 0 : index
    %273 = vector.load %arg8[%272, %c0_92, %c0_93] : memref<8x8x128xf32, #tpu.memory_space<vmem>>, vector<1x8x128xf32>
    %274 = vector.shape_cast %273 : vector<1x8x128xf32> to vector<8x128xf32>
    %275 = vector.shape_cast %271 : vector<8x128xf32> to vector<1x8x128xf32>
    tpu.vector_store %arg8[%272, %c0_92, %c0_93], %275 {strides = array<i32>} : memref<8x8x128xf32, #tpu.memory_space<vmem>>, vector<1x8x128xf32>,
    %c7_i32 = arith.constant 7 : i32
    %276 = arith.index_cast %c7_i32 : i32 to index
    %c0_94 = arith.constant 0 : index
    %c0_95 = arith.constant 0 : index
    %277 = vector.load %arg9[%276, %c0_94, %c0_95] : memref<8x8x384xf32, #tpu.memory_space<vmem>>, vector<1x8x384xf32>
    %278 = vector.shape_cast %277 : vector<1x8x384xf32> to vector<8x384xf32>
    %cst_96 = arith.constant dense<0.000000e+00> : vector<8x384xf32>
    %279 = tpu.matmul %271, %12, %cst_96 {dimension_numbers = #tpu.dot_dimension_numbers<[1], [0], [0], [1], [0, 0, 1, 1], [], []>} : vector<8x128xf32>, vector<128x384xf32>, vector<8x384xf32> -> vector<8x384xf32>
    %280 = vector.extract_strided_slice %278 {offsets = [0, 0], sizes = [8, 128], strides = [1, 1]} : vector<8x384xf32> to vector<8x128xf32>
    %281 = vector.extract_strided_slice %279 {offsets = [0, 0], sizes = [8, 128], strides = [1, 1]} : vector<8x384xf32> to vector<8x128xf32>
    %282 = arith.addf %280, %281 : vector<8x128xf32>
    %cst_97 = arith.constant 5.000000e-01 : f32
    %283 = vector.broadcast %cst_97 : f32 to vector<8x128xf32>
    %284 = arith.mulf %283, %282 : vector<8x128xf32>
    %285 = math.tanh %284 : vector<8x128xf32>
    %cst_98 = arith.constant 5.000000e-01 : f32
    %286 = vector.broadcast %cst_98 : f32 to vector<8x128xf32>
    %287 = arith.mulf %286, %285 : vector<8x128xf32>
    %cst_99 = arith.constant 5.000000e-01 : f32
    %288 = vector.broadcast %cst_99 : f32 to vector<8x128xf32>
    %289 = arith.addf %287, %288 : vector<8x128xf32>
    %290 = vector.extract_strided_slice %278 {offsets = [0, 128], sizes = [8, 128], strides = [1, 1]} : vector<8x384xf32> to vector<8x128xf32>
    %291 = vector.extract_strided_slice %279 {offsets = [0, 128], sizes = [8, 128], strides = [1, 1]} : vector<8x384xf32> to vector<8x128xf32>
    %292 = arith.addf %290, %291 : vector<8x128xf32>
    %cst_100 = arith.constant 5.000000e-01 : f32
    %293 = vector.broadcast %cst_100 : f32 to vector<8x128xf32>
    %294 = arith.mulf %293, %292 : vector<8x128xf32>
    %295 = math.tanh %294 : vector<8x128xf32>
    %cst_101 = arith.constant 5.000000e-01 : f32
    %296 = vector.broadcast %cst_101 : f32 to vector<8x128xf32>
    %297 = arith.mulf %296, %295 : vector<8x128xf32>
    %cst_102 = arith.constant 5.000000e-01 : f32
    %298 = vector.broadcast %cst_102 : f32 to vector<8x128xf32>
    %299 = arith.addf %297, %298 : vector<8x128xf32>
    %300 = vector.extract_strided_slice %278 {offsets = [0, 256], sizes = [8, 128], strides = [1, 1]} : vector<8x384xf32> to vector<8x128xf32>
    %301 = vector.extract_strided_slice %279 {offsets = [0, 256], sizes = [8, 128], strides = [1, 1]} : vector<8x384xf32> to vector<8x128xf32>
    %302 = arith.addf %301, %15 : vector<8x128xf32>
    %303 = arith.mulf %289, %302 : vector<8x128xf32>
    %304 = arith.addf %300, %303 : vector<8x128xf32>
    %305 = math.tanh %304 : vector<8x128xf32>
    %306 = arith.subf %271, %305 : vector<8x128xf32>
    %307 = arith.mulf %299, %306 : vector<8x128xf32>
    %308 = arith.addf %305, %307 : vector<8x128xf32>
    %309 = arith.index_cast %c7_i32 : i32 to index
    %c0_103 = arith.constant 0 : index
    %c0_104 = arith.constant 0 : index
    %310 = vector.load %arg8[%309, %c0_103, %c0_104] : memref<8x8x128xf32, #tpu.memory_space<vmem>>, vector<1x8x128xf32>
    %311 = vector.shape_cast %310 : vector<1x8x128xf32> to vector<8x128xf32>
    %312 = vector.shape_cast %308 : vector<8x128xf32> to vector<1x8x128xf32>
    tpu.vector_store %arg8[%309, %c0_103, %c0_104], %312 {strides = array<i32>} : memref<8x8x128xf32, #tpu.memory_space<vmem>>, vector<1x8x128xf32>,
    %c8_i32 = arith.constant 8 : i32
    %c0_105 = arith.constant 0 : index
    %c0_106 = arith.constant 0 : index
    %313 = vector.load %arg10[%c0_105, %c0_106] : memref<8x128xf32, #tpu.memory_space<vmem>>, vector<8x128xf32>
    tpu.vector_store %arg10[%c0_105, %c0_106], %308 {strides = array<i32>} : memref<8x128xf32, #tpu.memory_space<vmem>>, vector<8x128xf32>,
    return
  }
  func.func @transform_0(%arg0: i32, %arg1: i32) -> (i32, i32, i32) {
    %c0_i32 = arith.constant 0 : i32
    %c0_i32_0 = arith.constant 0 : i32
    return %arg1, %arg0, %c0_i32 : i32, i32, i32
  }
  func.func @transform_1(%arg0: i32, %arg1: i32) -> (i32, i32) {
    %c0_i32 = arith.constant 0 : i32
    %c0_i32_0 = arith.constant 0 : i32
    %c0_i32_1 = arith.constant 0 : i32
    return %c0_i32, %c0_i32_0 : i32, i32
  }
  func.func @transform_2(%arg0: i32, %arg1: i32) -> (i32, i32) {
    %c0_i32 = arith.constant 0 : i32
    %c0_i32_0 = arith.constant 0 : i32
    %c0_i32_1 = arith.constant 0 : i32
    return %c0_i32, %c0_i32_0 : i32, i32
  }
  func.func @transform_3(%arg0: i32, %arg1: i32) -> (i32, i32) {
    %c0_i32 = arith.constant 0 : i32
    %c0_i32_0 = arith.constant 0 : i32
    %c0_i32_1 = arith.constant 0 : i32
    return %c0_i32, %c0_i32_0 : i32, i32
  }
  func.func @transform_4(%arg0: i32, %arg1: i32) -> (i32, i32) {
    %c0_i32 = arith.constant 0 : i32
    %c0_i32_0 = arith.constant 0 : i32
    %c0_i32_1 = arith.constant 0 : i32
    return %c0_i32, %c0_i32_0 : i32, i32
  }
  func.func @transform_5(%arg0: i32, %arg1: i32) -> (i32, i32) {
    %c0_i32 = arith.constant 0 : i32
    %c0_i32_0 = arith.constant 0 : i32
    return %arg0, %c0_i32 : i32, i32
  }
  func.func @transform_6(%arg0: i32, %arg1: i32) -> (i32, i32, i32) {
    %c0_i32 = arith.constant 0 : i32
    %c0_i32_0 = arith.constant 0 : i32
    return %arg1, %arg0, %c0_i32 : i32, i32, i32
  }
}

</mosaic_0001>

<llo_original>
// kernel: tpu_custom_call.1
$region0: #{tpu_custom_call.1}
  #allocation0 [shape = 'u32[]', space=smem, size = 0x4, offset = 0x4, fixed_abs, tag = 'smem constant byte address 0x4 - core index']
  #allocation1 [shape = 'u32[144,128]{1,0:T(1,128)}', space=vmem, size = 0x12000, scoped, tag = 'internal scratch']
  #allocation2 [shape = 'f32[8,8,384]{2,1,0:T(8,128)}', space=vmem, size = 0x18000, scoped, tag = 'scratch operand']
  #allocation3 [shape = 'f32[8,128]{1,0:T(8,128)}', space=vmem, size = 0x1000, scoped, tag = 'scratch operand']
  %s0 = inlined_call_operand.hbm [shape: f32[8,8,128], index: 0, kind: input, shape index: {}]
  %s1 = inlined_call_operand.hbm [shape: f32[128,384], index: 1, kind: input, shape index: {}]
  %s2 = inlined_call_operand.hbm [shape: f32[128,384], index: 2, kind: input, shape index: {}]
  %s3 = inlined_call_operand.vmem [shape: f32[1,384], index: 3, kind: input, shape index: {}]
  %s4 = inlined_call_operand.vmem [shape: f32[1,128], index: 4, kind: input, shape index: {}]
  %s5 = inlined_call_operand.vmem [shape: f32[8,128], index: 5, kind: input, shape index: {}]
  %s6 = inlined_call_operand.hbm [shape: f32[8,8,128], index: 6, kind: output, shape index: {}]
  %s7 = sld [smem:[#allocation0]]
  $region50: #{tpu_custom_call.1} parent=0
    _
  %s9 = ssub.s32 1, %s7
  %s10 = scalar_select 0, %s9, %s7
  $region1: #{tpu_custom_call.1} parent=0
    #allocation4 [shape = 'u8[32768]{0}', space=vmem, size = 0x8000, scoped, tag = 'input window, operand 0, single buffered']
    #allocation5 [shape = 's32[1]{0}', space=sflag, size = 0x4, scoped, tag = 'scoped memory for tpu_custom_call.1']
    #allocation6 [shape = 's32[1]{0}', space=sflag, size = 0x4, scoped, tag = 'scoped memory for tpu_custom_call.1']
    #allocation7 [shape = 'u8[196608]{0}', space=vmem, size = 0x30000, scoped, tag = 'input window, operand 1, single buffered']
    #allocation8 [shape = 's32[1]{0}', space=sflag, size = 0x4, scoped, tag = 'scoped memory for tpu_custom_call.1']
    #allocation9 [shape = 'u8[196608]{0}', space=vmem, size = 0x30000, scoped, tag = 'input window, operand 2, single buffered']
    #allocation10 [shape = 'u8[32768]{0}', space=vmem, size = 0x8000, scoped, tag = 'output window, operand 0, single buffered']
    %11 = vsyncpa [#allocation5], 0
    %12 = vsyncpa [#allocation8], 0
    %13 = vsyncpa [#allocation6], 0
    // Predicated region
    $region2: #{tpu_custom_call.1} parent=1 // pred_check
      _
    $region3: #{tpu_custom_call.1} parent=1 // pred_check_branch
      %15 = sbr.rel (0) target = $region5
    $region4: #{tpu_custom_call.1} parent=1 // pred_region
      %s17 = ssub.s32 1024, 1024
      %18 = vsyncadd [#allocation5], %s17
      %s19 = sshll.u32 [#allocation4], 4
      %s20 = int_to_ptr.vmem [resolvable:$true] %s19
      %25 = dma.hbm_to_vmem [thread:$0]  %s0, 1024, %s20, [#allocation5], 128, 128, 8
    $region5: #{tpu_custom_call.1} parent=1 // pred_fallthru
      _
    // Predicated region
    $region6: #{tpu_custom_call.1} parent=1 // pred_check
      _
    $region7: #{tpu_custom_call.1} parent=1 // pred_check_branch
      %27 = sbr.rel (0) target = $region9
    $region8: #{tpu_custom_call.1} parent=1 // pred_region
      %s29 = ssub.s32 6144, 6144
      %30 = vsyncadd [#allocation8], %s29
      %s31 = sshll.u32 [#allocation7], 4
      %s32 = int_to_ptr.vmem [resolvable:$true] %s31
      %37 = dma.hbm_to_vmem [thread:$0]  %s1, 6144, %s32, [#allocation8], 384, 384, 24
    $region9: #{tpu_custom_call.1} parent=1 // pred_fallthru
      _
    // Predicated region
    $region10: #{tpu_custom_call.1} parent=1 // pred_check
      _
    $region11: #{tpu_custom_call.1} parent=1 // pred_check_branch
      %39 = sbr.rel (0) target = $region13
    $region12: #{tpu_custom_call.1} parent=1 // pred_region
      %s41 = ssub.s32 6144, 6144
      %42 = vsyncadd [#allocation8], %s41
      %s43 = sshll.u32 [#allocation9], 4
      %s44 = int_to_ptr.vmem [resolvable:$true] %s43
      %49 = dma.hbm_to_vmem [thread:$0]  %s2, 6144, %s44, [#allocation8], 384, 384, 24
    $region13: #{tpu_custom_call.1} parent=1 // pred_fallthru
      _
    // Predicated region
    $region14: #{tpu_custom_call.1} parent=1 // pred_check
      _
    $region15: #{tpu_custom_call.1} parent=1 // pred_check_branch
      %51 = sbr.rel (0) target = $region17
    $region16: #{tpu_custom_call.1} parent=1 // pred_region
      _
    $region17: #{tpu_custom_call.1} parent=1 // pred_fallthru
      _
    // Predicated region
    $region18: #{tpu_custom_call.1} parent=1 // pred_check
      _
    $region19: #{tpu_custom_call.1} parent=1 // pred_check_branch
      %53 = sbr.rel (0) target = $region21
    $region20: #{tpu_custom_call.1} parent=1 // pred_region
      _
    $region21: #{tpu_custom_call.1} parent=1 // pred_fallthru
      _
    // Predicated region
    $region22: #{tpu_custom_call.1} parent=1 // pred_check
      _
    $region23: #{tpu_custom_call.1} parent=1 // pred_check_branch
      %55 = sbr.rel (0) target = $region25
    $region24: #{tpu_custom_call.1} parent=1 // pred_region
      _
    $region25: #{tpu_custom_call.1} parent=1 // pred_fallthru
      _
    // Predicated region
    $region26: #{tpu_custom_call.1} parent=1 // pred_check
      _
    $region27: #{tpu_custom_call.1} parent=1 // pred_check_branch
      %57 = sbr.rel (0) target = $region29
    $region28: #{tpu_custom_call.1} parent=1 // pred_region
      %58 = dma.done [#allocation5], 1024
    $region29: #{tpu_custom_call.1} parent=1 // pred_fallthru
      _
    // Predicated region
    $region30: #{tpu_custom_call.1} parent=1 // pred_check
      _
    $region31: #{tpu_custom_call.1} parent=1 // pred_check_branch
      %60 = sbr.rel (0) target = $region33
    $region32: #{tpu_custom_call.1} parent=1 // pred_region
      %61 = dma.done [#allocation8], 6144
    $region33: #{tpu_custom_call.1} parent=1 // pred_fallthru
      _
    // Predicated region
    $region34: #{tpu_custom_call.1} parent=1 // pred_check
      _
    $region35: #{tpu_custom_call.1} parent=1 // pred_check_branch
      %63 = sbr.rel (0) target = $region37
    $region36: #{tpu_custom_call.1} parent=1 // pred_region
      %64 = dma.done [#allocation8], 6144
    $region37: #{tpu_custom_call.1} parent=1 // pred_fallthru
      _
    %p65 = scmp.eq.s32.totalorder 0, 0
    // Predicated region
    $region38: #{tpu_custom_call.1} parent=1 // pred_check
      %p66 = pneg %p65
    $region39: #{tpu_custom_call.1} parent=1 // pred_check_branch
      %68 = sbr.rel (%p66) target = $region41
    $region40: #{tpu_custom_call.1} parent=1 // pred_region
      %v69 = vld [vmem:[%s5] sm:$0xff]
      %70 = vst [vmem:[#allocation3] sm:$0xff] %v69
    $region41: #{tpu_custom_call.1} parent=1 // pred_fallthru
      _
    %v71 = vld [vmem:[#allocation4] sm:$0xff]
    %v72 = vld [vmem:[#allocation4 + $0x8] sm:$0xff]
    %v73 = vld [vmem:[#allocation4 + $0x10] sm:$0xff]
    %v74 = vld [vmem:[#allocation4 + $0x18] sm:$0xff]
    %v75 = vld [vmem:[#allocation4 + $0x20] sm:$0xff]
    %v76 = vld [vmem:[#allocation4 + $0x28] sm:$0xff]
    %v77 = vld [vmem:[#allocation4 + $0x30] sm:$0xff]
    %v78 = vld [vmem:[#allocation4 + $0x38] sm:$0xff]
    %v79 = vld [vmem:[#allocation7] sm:$0xff]
    %v80 = vld [vmem:[#allocation7 + $0x8] sm:$0xff]
    %v81 = vld [vmem:[#allocation7 + $0x10] sm:$0xff]
    %v82 = vld [vmem:[#allocation7 + $0x18] sm:$0xff]
    %v83 = vld [vmem:[#allocation7 + $0x20] sm:$0xff]
    %v84 = vld [vmem:[#allocation7 + $0x28] sm:$0xff]
    %v85 = vld [vmem:[#allocation7 + $0x30] sm:$0xff]
    %v86 = vld [vmem:[#allocation7 + $0x38] sm:$0xff]
    %v87 = vld [vmem:[#allocation7 + $0x40] sm:$0xff]
    %v88 = vld [vmem:[#allocation7 + $0x48] sm:$0xff]
    %v89 = vld [vmem:[#allocation7 + $0x50] sm:$0xff]
    %v90 = vld [vmem:[#allocation7 + $0x58] sm:$0xff]
    %v91 = vld [vmem:[#allocation7 + $0x60] sm:$0xff]
    %v92 = vld [vmem:[#allocation7 + $0x68] sm:$0xff]
    %v93 = vld [vmem:[#allocation7 + $0x70] sm:$0xff]
    %v94 = vld [vmem:[#allocation7 + $0x78] sm:$0xff]
    %v95 = vld [vmem:[#allocation7 + $0x80] sm:$0xff]
    %v96 = vld [vmem:[#allocation7 + $0x88] sm:$0xff]
    %v97 = vld [vmem:[#allocation7 + $0x90] sm:$0xff]
    %v98 = vld [vmem:[#allocation7 + $0x98] sm:$0xff]
    %v99 = vld [vmem:[#allocation7 + $0xa0] sm:$0xff]
    %v100 = vld [vmem:[#allocation7 + $0xa8] sm:$0xff]
    %v101 = vld [vmem:[#allocation7 + $0xb0] sm:$0xff]
    %v102 = vld [vmem:[#allocation7 + $0xb8] sm:$0xff]
    %v103 = vld [vmem:[#allocation7 + $0xc0] sm:$0xff]
    %v104 = vld [vmem:[#allocation7 + $0xc8] sm:$0xff]
    %v105 = vld [vmem:[#allocation7 + $0xd0] sm:$0xff]
    %v106 = vld [vmem:[#allocation7 + $0xd8] sm:$0xff]
    %v107 = vld [vmem:[#allocation7 + $0xe0] sm:$0xff]
    %v108 = vld [vmem:[#allocation7 + $0xe8] sm:$0xff]
    %v109 = vld [vmem:[#allocation7 + $0xf0] sm:$0xff]
    %v110 = vld [vmem:[#allocation7 + $0xf8] sm:$0xff]
    %v111 = vld [vmem:[#allocation7 + $0x100] sm:$0xff]
    %v112 = vld [vmem:[#allocation7 + $0x108] sm:$0xff]
    %v113 = vld [vmem:[#allocation7 + $0x110] sm:$0xff]
    %v114 = vld [vmem:[#allocation7 + $0x118] sm:$0xff]
    %v115 = vld [vmem:[#allocation7 + $0x120] sm:$0xff]
    %v116 = vld [vmem:[#allocation7 + $0x128] sm:$0xff]
    %v117 = vld [vmem:[#allocation7 + $0x130] sm:$0xff]
    %v118 = vld [vmem:[#allocation7 + $0x138] sm:$0xff]
    %v119 = vld [vmem:[#allocation7 + $0x140] sm:$0xff]
    %v120 = vld [vmem:[#allocation7 + $0x148] sm:$0xff]
    %v121 = vld [vmem:[#allocation7 + $0x150] sm:$0xff]
    %v122 = vld [vmem:[#allocation7 + $0x158] sm:$0xff]
    %v123 = vld [vmem:[#allocation7 + $0x160] sm:$0xff]
    %v124 = vld [vmem:[#allocation7 + $0x168] sm:$0xff]
    %v125 = vld [vmem:[#allocation7 + $0x170] sm:$0xff]
    %v126 = vld [vmem:[#allocation7 + $0x178] sm:$0xff]
    %v127 = vld [vmem:[%s3] sm:$0x7]
    %v129 = vlaneseq
    %v130 = vshrl.u32 %v129, 7
    %v131 = vsub.s32 0, %v130
    %v132 = vrot.slane %v127, %v131
    %v133 = vlaneseq
    %v134 = vshrl.u32 %v133, 7
    %v135 = vsub.s32 1, %v134
    %v136 = vrot.slane %v127, %v135
    %v137 = vlaneseq
    %v138 = vshrl.u32 %v137, 7
    %v139 = vsub.s32 2, %v138
    %v140 = vrot.slane %v127, %v139
    %144 = vmatprep.subr.mxu0 %v80
    %145 = vmatpush1.msra.mxu0 %v79
    %146 = vmatprep.subr.mxu0 %v83
    %147 = vmatpush1.msra.mxu0 %v82
    %148 = vmatprep.subr.mxu0 %v86
    %149 = vmatpush1.msra.mxu0 %v85
    %150 = vmatprep.subr.mxu0 %v89
    %151 = vmatpush1.msra.mxu0 %v88
    %152 = vmatprep.subr.mxu0 %v92
    %153 = vmatpush1.msra.mxu0 %v91
    %154 = vmatprep.subr.mxu0 %v95
    %155 = vmatpush1.msra.mxu0 %v94
    %156 = vmatprep.subr.mxu0 %v98
    %157 = vmatpush1.msra.mxu0 %v97
    %158 = vmatprep.subr.mxu0 %v101
    %159 = vmatpush1.msra.mxu0 %v100
    %160 = vmatprep.subr.mxu0 %v104
    %161 = vmatpush1.msra.mxu0 %v103
    %162 = vmatprep.subr.mxu0 %v107
    %163 = vmatpush1.msra.mxu0 %v106
    %164 = vmatprep.subr.mxu0 %v110
    %165 = vmatpush1.msra.mxu0 %v109
    %166 = vmatprep.subr.mxu0 %v113
    %167 = vmatpush1.msra.mxu0 %v112
    %168 = vmatprep.subr.mxu0 %v116
    %169 = vmatpush1.msra.mxu0 %v115
    %170 = vmatprep.subr.mxu0 %v119
    %171 = vmatpush1.msra.mxu0 %v118
    %172 = vmatprep.subr.mxu0 %v122
    %173 = vmatpush1.msra.mxu0 %v121
    %174 = vmatprep.subr.mxu0 %v125
    %175 = vmatpush1.msra.mxu0 %v124
    %176 = vmatprep.subr.mxu0 0.0
    %177 = vmatpush1.msra.mxu0 0.0
    %178 = vmatprep.subr.mxu0 0.0
    %179 = vmatpush1.msra.mxu0 0.0
    %180 = vmatprep.subr.mxu0 0.0
    %181 = vmatpush1.msra.mxu0 0.0
    %182 = vmatprep.subr.mxu0 0.0
    %183 = vmatpush1.msra.mxu0 0.0
    %184 = vmatprep.subr.mxu0 0.0
    %185 = vmatpush1.msra.mxu0 0.0
    %186 = vmatprep.subr.mxu0 0.0
    %187 = vmatpush1.msra.mxu0 0.0
    %188 = vmatprep.subr.mxu0 0.0
    %189 = vmatpush1.msra.mxu0 0.0
    %190 = vmatprep.subr.mxu0 0.0
    %191 = vmatpush1.msra.mxu0 0.0
    %192 = vmatprep.subr.mxu0 0.0
    %193 = vmatpush1.msra.mxu0 0.0
    %194 = vmatprep.subr.mxu0 0.0
    %195 = vmatpush1.msra.mxu0 0.0
    %196 = vmatprep.subr.mxu0 0.0
    %197 = vmatpush1.msra.mxu0 0.0
    %198 = vmatprep.subr.mxu0 0.0
    %199 = vmatpush1.msra.mxu0 0.0
    %200 = vmatprep.subr.mxu0 0.0
    %201 = vmatpush1.msra.mxu0 0.0
    %202 = vmatprep.subr.mxu0 0.0
    %203 = vmatpush1.msra.mxu0 0.0
    %204 = vmatprep.subr.mxu0 0.0
    %205 = vmatpush1.msra.mxu0 0.0
    %206 = vmatprep.subr.mxu0 0.0
    %207 = vmatpush1.msra.mxu0 0.0
    %208 = vmatprep.mubr.f32.mxu0 0.0
    %209 = vmatmul.mubr.f32.gmra.mrb[0].mxu0 %v71
    %v210 = vpop.f32.mrb[0].mxu0
    %v211 = vadd.f32 %v132, %v210
    %v212 = vpop.f32.mrb[0].mxu0
    %v213 = vadd.f32 %v136, %v212
    %214 = vmatprep.mubr.f32.mxu0 0.0
    %215 = vmatmul.mubr.f32.gmra.mrb[0].mxu0 %v72
    %v216 = vpop.f32.mrb[0].mxu0
    %v217 = vadd.f32 %v132, %v216
    %v218 = vpop.f32.mrb[0].mxu0
    %v219 = vadd.f32 %v136, %v218
    %220 = vmatprep.mubr.f32.mxu0 0.0
    %221 = vmatmul.mubr.f32.gmra.mrb[0].mxu0 %v73
    %v222 = vpop.f32.mrb[0].mxu0
    %v223 = vadd.f32 %v132, %v222
    %v224 = vpop.f32.mrb[0].mxu0
    %v225 = vadd.f32 %v136, %v224
    %226 = vmatprep.mubr.f32.mxu0 0.0
    %227 = vmatmul.mubr.f32.gmra.mrb[0].mxu0 %v74
    %v228 = vpop.f32.mrb[0].mxu0
    %v229 = vadd.f32 %v132, %v228
    %v230 = vpop.f32.mrb[0].mxu0
    %v231 = vadd.f32 %v136, %v230
    %232 = vmatprep.mubr.f32.mxu0 0.0
    %233 = vmatmul.mubr.f32.gmra.mrb[0].mxu0 %v75
    %v234 = vpop.f32.mrb[0].mxu0
    %v235 = vadd.f32 %v132, %v234
    %v236 = vpop.f32.mrb[0].mxu0
    %v237 = vadd.f32 %v136, %v236
    %238 = vmatprep.mubr.f32.mxu0 0.0
    %239 = vmatmul.mubr.f32.gmra.mrb[0].mxu0 %v76
    %v240 = vpop.f32.mrb[0].mxu0
    %v241 = vadd.f32 %v132, %v240
    %v242 = vpop.f32.mrb[0].mxu0
    %v243 = vadd.f32 %v136, %v242
    %244 = vmatprep.mubr.f32.mxu0 0.0
    %245 = vmatmul.mubr.f32.gmra.mrb[0].mxu0 %v77
    %v246 = vpop.f32.mrb[0].mxu0
    %v247 = vadd.f32 %v132, %v246
    %v248 = vpop.f32.mrb[0].mxu0
    %v249 = vadd.f32 %v136, %v248
    %250 = vmatprep.mubr.f32.mxu0 0.0
    %251 = vmatmul.mubr.f32.gmra.mrb[0].mxu0 %v78
    %v252 = vpop.f32.mrb[0].mxu0
    %v253 = vadd.f32 %v132, %v252
    %v254 = vpop.f32.mrb[0].mxu0
    %v255 = vadd.f32 %v136, %v254
    %256 = vdwg.mxu0
    %257 = vmatprep.subr.mxu0 0.0
    %258 = vmatpush1.msra.mxu0 %v81
    %259 = vmatprep.subr.mxu0 0.0
    %260 = vmatpush1.msra.mxu0 %v84
    %261 = vmatprep.subr.mxu0 0.0
    %262 = vmatpush1.msra.mxu0 %v87
    %263 = vmatprep.subr.mxu0 0.0
    %264 = vmatpush1.msra.mxu0 %v90
    %265 = vmatprep.subr.mxu0 0.0
    %266 = vmatpush1.msra.mxu0 %v93
    %267 = vmatprep.subr.mxu0 0.0
    %268 = vmatpush1.msra.mxu0 %v96
    %269 = vmatprep.subr.mxu0 0.0
    %270 = vmatpush1.msra.mxu0 %v99
    %271 = vmatprep.subr.mxu0 0.0
    %272 = vmatpush1.msra.mxu0 %v102
    %273 = vmatprep.subr.mxu0 0.0
    %274 = vmatpush1.msra.mxu0 %v105
    %275 = vmatprep.subr.mxu0 0.0
    %276 = vmatpush1.msra.mxu0 %v108
    %277 = vmatprep.subr.mxu0 0.0
    %278 = vmatpush1.msra.mxu0 %v111
    %279 = vmatprep.subr.mxu0 0.0
    %280 = vmatpush1.msra.mxu0 %v114
    %281 = vmatprep.subr.mxu0 0.0
    %282 = vmatpush1.msra.mxu0 %v117
    %283 = vmatprep.subr.mxu0 0.0
    %284 = vmatpush1.msra.mxu0 %v120
    %285 = vmatprep.subr.mxu0 0.0
    %286 = vmatpush1.msra.mxu0 %v123
    %287 = vmatprep.subr.mxu0 0.0
    %288 = vmatpush1.msra.mxu0 %v126
    %289 = vmatprep.subr.mxu0 0.0
    %290 = vmatpush1.msra.mxu0 0.0
    %291 = vmatprep.subr.mxu0 0.0
    %292 = vmatpush1.msra.mxu0 0.0
    %293 = vmatprep.subr.mxu0 0.0
    %294 = vmatpush1.msra.mxu0 0.0
    %295 = vmatprep.subr.mxu0 0.0
    %296 = vmatpush1.msra.mxu0 0.0
    %297 = vmatprep.subr.mxu0 0.0
    %298 = vmatpush1.msra.mxu0 0.0
    %299 = vmatprep.subr.mxu0 0.0
    %300 = vmatpush1.msra.mxu0 0.0
    %301 = vmatprep.subr.mxu0 0.0
    %302 = vmatpush1.msra.mxu0 0.0
    %303 = vmatprep.subr.mxu0 0.0
    %304 = vmatpush1.msra.mxu0 0.0
    %305 = vmatprep.subr.mxu0 0.0
    %306 = vmatpush1.msra.mxu0 0.0
    %307 = vmatprep.subr.mxu0 0.0
    %308 = vmatpush1.msra.mxu0 0.0
    %309 = vmatprep.subr.mxu0 0.0
    %310 = vmatpush1.msra.mxu0 0.0
    %311 = vmatprep.subr.mxu0 0.0
    %312 = vmatpush1.msra.mxu0 0.0
    %313 = vmatprep.subr.mxu0 0.0
    %314 = vmatpush1.msra.mxu0 0.0
    %315 = vmatprep.subr.mxu0 0.0
    %316 = vmatpush1.msra.mxu0 0.0
    %317 = vmatprep.subr.mxu0 0.0
    %318 = vmatpush1.msra.mxu0 0.0
    %319 = vmatprep.subr.mxu0 0.0
    %320 = vmatpush1.msra.mxu0 0.0
    %321 = vmatprep.mubr.f32.mxu0 0.0
    %322 = vmatmul.mubr.f32.gmra.mrb[0].mxu0 %v71
    %v323 = vpop.f32.mrb[0].mxu0
    %v324 = vadd.f32 %v140, %v323
    %v325 = vpop.f32.mrb[0].mxu0
    %326 = vmatprep.mubr.f32.mxu0 0.0
    %327 = vmatmul.mubr.f32.gmra.mrb[0].mxu0 %v72
    %v328 = vpop.f32.mrb[0].mxu0
    %v329 = vadd.f32 %v140, %v328
    %v330 = vpop.f32.mrb[0].mxu0
    %331 = vmatprep.mubr.f32.mxu0 0.0
    %332 = vmatmul.mubr.f32.gmra.mrb[0].mxu0 %v73
    %v333 = vpop.f32.mrb[0].mxu0
    %v334 = vadd.f32 %v140, %v333
    %v335 = vpop.f32.mrb[0].mxu0
    %336 = vmatprep.mubr.f32.mxu0 0.0
    %337 = vmatmul.mubr.f32.gmra.mrb[0].mxu0 %v74
    %v338 = vpop.f32.mrb[0].mxu0
    %v339 = vadd.f32 %v140, %v338
    %v340 = vpop.f32.mrb[0].mxu0
    %341 = vmatprep.mubr.f32.mxu0 0.0
    %342 = vmatmul.mubr.f32.gmra.mrb[0].mxu0 %v75
    %v343 = vpop.f32.mrb[0].mxu0
    %v344 = vadd.f32 %v140, %v343
    %v345 = vpop.f32.mrb[0].mxu0
    %346 = vmatprep.mubr.f32.mxu0 0.0
    %347 = vmatmul.mubr.f32.gmra.mrb[0].mxu0 %v76
    %v348 = vpop.f32.mrb[0].mxu0
    %v349 = vadd.f32 %v140, %v348
    %v350 = vpop.f32.mrb[0].mxu0
    %351 = vmatprep.mubr.f32.mxu0 0.0
    %352 = vmatmul.mubr.f32.gmra.mrb[0].mxu0 %v77
    %v353 = vpop.f32.mrb[0].mxu0
    %v354 = vadd.f32 %v140, %v353
    %v355 = vpop.f32.mrb[0].mxu0
    %356 = vmatprep.mubr.f32.mxu0 0.0
    %357 = vmatmul.mubr.f32.gmra.mrb[0].mxu0 %v78
    %v358 = vpop.f32.mrb[0].mxu0
    %v359 = vadd.f32 %v140, %v358
    %v360 = vpop.f32.mrb[0].mxu0
    %361 = vdwg.mxu0
    %362 = vst [vmem:[#allocation2] sm:$0xff] %v211
    %363 = vst [vmem:[#allocation2 + $0x8] sm:$0xff] %v213
    %364 = vst [vmem:[#allocation2 + $0x10] sm:$0xff] %v324
    %365 = vst [vmem:[#allocation2 + $0x18] sm:$0xff] %v217
    %366 = vst [vmem:[#allocation2 + $0x20] sm:$0xff] %v219
    %367 = vst [vmem:[#allocation2 + $0x28] sm:$0xff] %v329
    %368 = vst [vmem:[#allocation2 + $0x30] sm:$0xff] %v223
    %369 = vst [vmem:[#allocation2 + $0x38] sm:$0xff] %v225
    %370 = vst [vmem:[#allocation2 + $0x40] sm:$0xff] %v334
    %371 = vst [vmem:[#allocation2 + $0x48] sm:$0xff] %v229
    %372 = vst [vmem:[#allocation2 + $0x50] sm:$0xff] %v231
    %373 = vst [vmem:[#allocation2 + $0x58] sm:$0xff] %v339
    %374 = vst [vmem:[#allocation2 + $0x60] sm:$0xff] %v235
    %375 = vst [vmem:[#allocation2 + $0x68] sm:$0xff] %v237
    %376 = vst [vmem:[#allocation2 + $0x70] sm:$0xff] %v344
    %377 = vst [vmem:[#allocation2 + $0x78] sm:$0xff] %v241
    %378 = vst [vmem:[#allocation2 + $0x80] sm:$0xff] %v243
    %379 = vst [vmem:[#allocation2 + $0x88] sm:$0xff] %v349
    %380 = vst [vmem:[#allocation2 + $0x90] sm:$0xff] %v247
    %381 = vst [vmem:[#allocation2 + $0x98] sm:$0xff] %v249
    %382 = vst [vmem:[#allocation2 + $0xa0] sm:$0xff] %v354
    %383 = vst [vmem:[#allocation2 + $0xa8] sm:$0xff] %v253
    %384 = vst [vmem:[#allocation2 + $0xb0] sm:$0xff] %v255
    %385 = vst [vmem:[#allocation2 + $0xb8] sm:$0xff] %v359
    %v386 = vld [vmem:[#allocation9] sm:$0xff]
    %v387 = vld [vmem:[#allocation9 + $0x8] sm:$0xff]
    %v388 = vld [vmem:[#allocation9 + $0x10] sm:$0xff]
    %v389 = vld [vmem:[#allocation9 + $0x18] sm:$0xff]
    %v390 = vld [vmem:[#allocation9 + $0x20] sm:$0xff]
    %v391 = vld [vmem:[#allocation9 + $0x28] sm:$0xff]
    %v392 = vld [vmem:[#allocation9 + $0x30] sm:$0xff]
    %v393 = vld [vmem:[#allocation9 + $0x38] sm:$0xff]
    %v394 = vld [vmem:[#allocation9 + $0x40] sm:$0xff]
    %v395 = vld [vmem:[#allocation9 + $0x48] sm:$0xff]
    %v396 = vld [vmem:[#allocation9 + $0x50] sm:$0xff]
    %v397 = vld [vmem:[#allocation9 + $0x58] sm:$0xff]
    %v398 = vld [vmem:[#allocation9 + $0x60] sm:$0xff]
    %v399 = vld [vmem:[#allocation9 + $0x68] sm:$0xff]
    %v400 = vld [vmem:[#allocation9 + $0x70] sm:$0xff]
    %v401 = vld [vmem:[#allocation9 + $0x78] sm:$0xff]
    %v402 = vld [vmem:[#allocation9 + $0x80] sm:$0xff]
    %v403 = vld [vmem:[#allocation9 + $0x88] sm:$0xff]
    %v404 = vld [vmem:[#allocation9 + $0x90] sm:$0xff]
    %v405 = vld [vmem:[#allocation9 + $0x98] sm:$0xff]
    %v406 = vld [vmem:[#allocation9 + $0xa0] sm:$0xff]
    %v407 = vld [vmem:[#allocation9 + $0xa8] sm:$0xff]
    %v408 = vld [vmem:[#allocation9 + $0xb0] sm:$0xff]
    %v409 = vld [vmem:[#allocation9 + $0xb8] sm:$0xff]
    %v410 = vld [vmem:[#allocation9 + $0xc0] sm:$0xff]
    %v411 = vld [vmem:[#allocation9 + $0xc8] sm:$0xff]
    %v412 = vld [vmem:[#allocation9 + $0xd0] sm:$0xff]
    %v413 = vld [vmem:[#allocation9 + $0xd8] sm:$0xff]
    %v414 = vld [vmem:[#allocation9 + $0xe0] sm:$0xff]
    %v415 = vld [vmem:[#allocation9 + $0xe8] sm:$0xff]
    %v416 = vld [vmem:[#allocation9 + $0xf0] sm:$0xff]
    %v417 = vld [vmem:[#allocation9 + $0xf8] sm:$0xff]
    %v418 = vld [vmem:[#allocation9 + $0x100] sm:$0xff]
    %v419 = vld [vmem:[#allocation9 + $0x108] sm:$0xff]
    %v420 = vld [vmem:[#allocation9 + $0x110] sm:$0xff]
    %v421 = vld [vmem:[#allocation9 + $0x118] sm:$0xff]
    %v422 = vld [vmem:[#allocation9 + $0x120] sm:$0xff]
    %v423 = vld [vmem:[#allocation9 + $0x128] sm:$0xff]
    %v424 = vld [vmem:[#allocation9 + $0x130] sm:$0xff]
    %v425 = vld [vmem:[#allocation9 + $0x138] sm:$0xff]
    %v426 = vld [vmem:[#allocation9 + $0x140] sm:$0xff]
    %v427 = vld [vmem:[#allocation9 + $0x148] sm:$0xff]
    %v428 = vld [vmem:[#allocation9 + $0x150] sm:$0xff]
    %v429 = vld [vmem:[#allocation9 + $0x158] sm:$0xff]
    %v430 = vld [vmem:[#allocation9 + $0x160] sm:$0xff]
    %v431 = vld [vmem:[#allocation9 + $0x168] sm:$0xff]
    %v432 = vld [vmem:[#allocation9 + $0x170] sm:$0xff]
    %v433 = vld [vmem:[#allocation9 + $0x178] sm:$0xff]
    %v434 = vld [vmem:[%s4] sm:$0x1]
    %v436 = vlaneseq
    %v437 = vshrl.u32 %v436, 7
    %v438 = vsub.s32 0, %v437
    %v439 = vrot.slane %v434, %v438
    %v441 = vld [vmem:[#allocation3] sm:$0xff]
    %v442 = vld [vmem:[#allocation2] sm:$0xff]
    %v443 = vld [vmem:[#allocation2 + $0x8] sm:$0xff]
    %v444 = vld [vmem:[#allocation2 + $0x10] sm:$0xff]
    %445 = vmatprep.subr.mxu0 %v387
    %446 = vmatpush1.msra.mxu0 %v386
    %447 = vmatprep.subr.mxu0 %v390
    %448 = vmatpush1.msra.mxu0 %v389
    %449 = vmatprep.subr.mxu0 %v393
    %450 = vmatpush1.msra.mxu0 %v392
    %451 = vmatprep.subr.mxu0 %v396
    %452 = vmatpush1.msra.mxu0 %v395
    %453 = vmatprep.subr.mxu0 %v399
    %454 = vmatpush1.msra.mxu0 %v398
    %455 = vmatprep.subr.mxu0 %v402
    %456 = vmatpush1.msra.mxu0 %v401
    %457 = vmatprep.subr.mxu0 %v405
    %458 = vmatpush1.msra.mxu0 %v404
    %459 = vmatprep.subr.mxu0 %v408
    %460 = vmatpush1.msra.mxu0 %v407
    %461 = vmatprep.subr.mxu0 %v411
    %462 = vmatpush1.msra.mxu0 %v410
    %463 = vmatprep.subr.mxu0 %v414
    %464 = vmatpush1.msra.mxu0 %v413
    %465 = vmatprep.subr.mxu0 %v417
    %466 = vmatpush1.msra.mxu0 %v416
    %467 = vmatprep.subr.mxu0 %v420
    %468 = vmatpush1.msra.mxu0 %v419
    %469 = vmatprep.subr.mxu0 %v423
    %470 = vmatpush1.msra.mxu0 %v422
    %471 = vmatprep.subr.mxu0 %v426
    %472 = vmatpush1.msra.mxu0 %v425
    %473 = vmatprep.subr.mxu0 %v429
    %474 = vmatpush1.msra.mxu0 %v428
    %475 = vmatprep.subr.mxu0 %v432
    %476 = vmatpush1.msra.mxu0 %v431
    %477 = vmatprep.subr.mxu0 0.0
    %478 = vmatpush1.msra.mxu0 0.0
    %479 = vmatprep.subr.mxu0 0.0
    %480 = vmatpush1.msra.mxu0 0.0
    %481 = vmatprep.subr.mxu0 0.0
    %482 = vmatpush1.msra.mxu0 0.0
    %483 = vmatprep.subr.mxu0 0.0
    %484 = vmatpush1.msra.mxu0 0.0
    %485 = vmatprep.subr.mxu0 0.0
    %486 = vmatpush1.msra.mxu0 0.0
    %487 = vmatprep.subr.mxu0 0.0
    %488 = vmatpush1.msra.mxu0 0.0
    %489 = vmatprep.subr.mxu0 0.0
    %490 = vmatpush1.msra.mxu0 0.0
    %491 = vmatprep.subr.mxu0 0.0
    %492 = vmatpush1.msra.mxu0 0.0
    %493 = vmatprep.subr.mxu0 0.0
    %494 = vmatpush1.msra.mxu0 0.0
    %495 = vmatprep.subr.mxu0 0.0
    %496 = vmatpush1.msra.mxu0 0.0
    %497 = vmatprep.subr.mxu0 0.0
    %498 = vmatpush1.msra.mxu0 0.0
    %499 = vmatprep.subr.mxu0 0.0
    %500 = vmatpush1.msra.mxu0 0.0
    %501 = vmatprep.subr.mxu0 0.0
    %502 = vmatpush1.msra.mxu0 0.0
    %503 = vmatprep.subr.mxu0 0.0
    %504 = vmatpush1.msra.mxu0 0.0
    %505 = vmatprep.subr.mxu0 0.0
    %506 = vmatpush1.msra.mxu0 0.0
    %507 = vmatprep.subr.mxu0 0.0
    %508 = vmatpush1.msra.mxu0 0.0
    %509 = vmatprep.mubr.f32.mxu0 0.0
    %510 = vmatmul.mubr.f32.gmra.mrb[0].mxu0 %v441
    %v511 = vpop.f32.mrb[0].mxu0
    %v512 = vadd.f32 0.0, %v511
    %v513 = vpop.f32.mrb[0].mxu0
    %v514 = vadd.f32 0.0, %v513
    %515 = vdwg.mxu0
    %516 = vmatprep.subr.mxu0 0.0
    %517 = vmatpush1.msra.mxu0 %v388
    %518 = vmatprep.subr.mxu0 0.0
    %519 = vmatpush1.msra.mxu0 %v391
    %520 = vmatprep.subr.mxu0 0.0
    %521 = vmatpush1.msra.mxu0 %v394
    %522 = vmatprep.subr.mxu0 0.0
    %523 = vmatpush1.msra.mxu0 %v397
    %524 = vmatprep.subr.mxu0 0.0
    %525 = vmatpush1.msra.mxu0 %v400
    %526 = vmatprep.subr.mxu0 0.0
    %527 = vmatpush1.msra.mxu0 %v403
    %528 = vmatprep.subr.mxu0 0.0
    %529 = vmatpush1.msra.mxu0 %v406
    %530 = vmatprep.subr.mxu0 0.0
    %531 = vmatpush1.msra.mxu0 %v409
    %532 = vmatprep.subr.mxu0 0.0
    %533 = vmatpush1.msra.mxu0 %v412
    %534 = vmatprep.subr.mxu0 0.0
    %535 = vmatpush1.msra.mxu0 %v415
    %536 = vmatprep.subr.mxu0 0.0
    %537 = vmatpush1.msra.mxu0 %v418
    %538 = vmatprep.subr.mxu0 0.0
    %539 = vmatpush1.msra.mxu0 %v421
    %540 = vmatprep.subr.mxu0 0.0
    %541 = vmatpush1.msra.mxu0 %v424
    %542 = vmatprep.subr.mxu0 0.0
    %543 = vmatpush1.msra.mxu0 %v427
    %544 = vmatprep.subr.mxu0 0.0
    %545 = vmatpush1.msra.mxu0 %v430
    %546 = vmatprep.subr.mxu0 0.0
    %547 = vmatpush1.msra.mxu0 %v433
    %548 = vmatprep.subr.mxu0 0.0
    %549 = vmatpush1.msra.mxu0 0.0
    %550 = vmatprep.subr.mxu0 0.0
    %551 = vmatpush1.msra.mxu0 0.0
    %552 = vmatprep.subr.mxu0 0.0
    %553 = vmatpush1.msra.mxu0 0.0
    %554 = vmatprep.subr.mxu0 0.0
    %555 = vmatpush1.msra.mxu0 0.0
    %556 = vmatprep.subr.mxu0 0.0
    %557 = vmatpush1.msra.mxu0 0.0
    %558 = vmatprep.subr.mxu0 0.0
    %559 = vmatpush1.msra.mxu0 0.0
    %560 = vmatprep.subr.mxu0 0.0
    %561 = vmatpush1.msra.mxu0 0.0
    %562 = vmatprep.subr.mxu0 0.0
    %563 = vmatpush1.msra.mxu0 0.0
    %564 = vmatprep.subr.mxu0 0.0
    %565 = vmatpush1.msra.mxu0 0.0
    %566 = vmatprep.subr.mxu0 0.0
    %567 = vmatpush1.msra.mxu0 0.0
    %568 = vmatprep.subr.mxu0 0.0
    %569 = vmatpush1.msra.mxu0 0.0
    %570 = vmatprep.subr.mxu0 0.0
    %571 = vmatpush1.msra.mxu0 0.0
    %572 = vmatprep.subr.mxu0 0.0
    %573 = vmatpush1.msra.mxu0 0.0
    %574 = vmatprep.subr.mxu0 0.0
    %575 = vmatpush1.msra.mxu0 0.0
    %576 = vmatprep.subr.mxu0 0.0
    %577 = vmatpush1.msra.mxu0 0.0
    %578 = vmatprep.subr.mxu0 0.0
    %579 = vmatpush1.msra.mxu0 0.0
    %580 = vmatprep.mubr.f32.mxu0 0.0
    %581 = vmatmul.mubr.f32.gmra.mrb[0].mxu0 %v441
    %v582 = vpop.f32.mrb[0].mxu0
    %v583 = vadd.f32 0.0, %v582
    %v584 = vpop.f32.mrb[0].mxu0
    %585 = vdwg.mxu0
    %v586 = vadd.f32 %v442, %v512
    %v587 = vmul.f32 %v586, 0.5
    %v588 = vtanh.pop %v587
    %v589 = vmul.f32 %v588, 0.5
    %v590 = vadd.f32 %v589, 0.5
    %v591 = vadd.f32 %v443, %v514
    %v592 = vmul.f32 %v591, 0.5
    %v593 = vtanh.pop %v592
    %v594 = vmul.f32 %v593, 0.5
    %v595 = vadd.f32 %v594, 0.5
    %v596 = vadd.f32 %v583, %v439
    %v597 = vmul.f32 %v590, %v596
    %v598 = vadd.f32 %v444, %v597
    %v599 = vtanh.pop %v598
    %v600 = vsub.f32 %v441, %v599
    %v601 = vmul.f32 %v595, %v600
    %v602 = vadd.f32 %v599, %v601
    %603 = vst [vmem:[#allocation10] sm:$0xff] %v602
    %s604 = scalar_lea.vmem [#allocation2], 24
    %v605 = vld [vmem:[%s604] sm:$0xff]
    %v606 = vld [vmem:[%s604 + $0x8] sm:$0xff]
    %v607 = vld [vmem:[%s604 + $0x10] sm:$0xff]
    %608 = vmatprep.subr.mxu0 %v387
    %609 = vmatpush1.msra.mxu0 %v386
    %610 = vmatprep.subr.mxu0 %v390
    %611 = vmatpush1.msra.mxu0 %v389
    %612 = vmatprep.subr.mxu0 %v393
    %613 = vmatpush1.msra.mxu0 %v392
    %614 = vmatprep.subr.mxu0 %v396
    %615 = vmatpush1.msra.mxu0 %v395
    %616 = vmatprep.subr.mxu0 %v399
    %617 = vmatpush1.msra.mxu0 %v398
    %618 = vmatprep.subr.mxu0 %v402
    %619 = vmatpush1.msra.mxu0 %v401
    %620 = vmatprep.subr.mxu0 %v405
    %621 = vmatpush1.msra.mxu0 %v404
    %622 = vmatprep.subr.mxu0 %v408
    %623 = vmatpush1.msra.mxu0 %v407
    %624 = vmatprep.subr.mxu0 %v411
    %625 = vmatpush1.msra.mxu0 %v410
    %626 = vmatprep.subr.mxu0 %v414
    %627 = vmatpush1.msra.mxu0 %v413
    %628 = vmatprep.subr.mxu0 %v417
    %629 = vmatpush1.msra.mxu0 %v416
    %630 = vmatprep.subr.mxu0 %v420
    %631 = vmatpush1.msra.mxu0 %v419
    %632 = vmatprep.subr.mxu0 %v423
    %633 = vmatpush1.msra.mxu0 %v422
    %634 = vmatprep.subr.mxu0 %v426
    %635 = vmatpush1.msra.mxu0 %v425
    %636 = vmatprep.subr.mxu0 %v429
    %637 = vmatpush1.msra.mxu0 %v428
    %638 = vmatprep.subr.mxu0 %v432
    %639 = vmatpush1.msra.mxu0 %v431
    %640 = vmatprep.subr.mxu0 0.0
    %641 = vmatpush1.msra.mxu0 0.0
    %642 = vmatprep.subr.mxu0 0.0
    %643 = vmatpush1.msra.mxu0 0.0
    %644 = vmatprep.subr.mxu0 0.0
    %645 = vmatpush1.msra.mxu0 0.0
    %646 = vmatprep.subr.mxu0 0.0
    %647 = vmatpush1.msra.mxu0 0.0
    %648 = vmatprep.subr.mxu0 0.0
    %649 = vmatpush1.msra.mxu0 0.0
    %650 = vmatprep.subr.mxu0 0.0
    %651 = vmatpush1.msra.mxu0 0.0
    %652 = vmatprep.subr.mxu0 0.0
    %653 = vmatpush1.msra.mxu0 0.0
    %654 = vmatprep.subr.mxu0 0.0
    %655 = vmatpush1.msra.mxu0 0.0
    %656 = vmatprep.subr.mxu0 0.0
    %657 = vmatpush1.msra.mxu0 0.0
    %658 = vmatprep.subr.mxu0 0.0
    %659 = vmatpush1.msra.mxu0 0.0
    %660 = vmatprep.subr.mxu0 0.0
    %661 = vmatpush1.msra.mxu0 0.0
    %662 = vmatprep.subr.mxu0 0.0
    %663 = vmatpush1.msra.mxu0 0.0
    %664 = vmatprep.subr.mxu0 0.0
    %665 = vmatpush1.msra.mxu0 0.0
    %666 = vmatprep.subr.mxu0 0.0
    %667 = vmatpush1.msra.mxu0 0.0
    %668 = vmatprep.subr.mxu0 0.0
    %669 = vmatpush1.msra.mxu0 0.0
    %670 = vmatprep.subr.mxu0 0.0
    %671 = vmatpush1.msra.mxu0 0.0
    %672 = vmatprep.mubr.f32.mxu0 0.0
    %673 = vmatmul.mubr.f32.gmra.mrb[0].mxu0 %v602
    %v674 = vpop.f32.mrb[0].mxu0
    %v675 = vadd.f32 0.0, %v674
    %v676 = vpop.f32.mrb[0].mxu0
    %v677 = vadd.f32 0.0, %v676
    %678 = vdwg.mxu0
    %679 = vmatprep.subr.mxu0 0.0
    %680 = vmatpush1.msra.mxu0 %v388
    %681 = vmatprep.subr.mxu0 0.0
    %682 = vmatpush1.msra.mxu0 %v391
    %683 = vmatprep.subr.mxu0 0.0
    %684 = vmatpush1.msra.mxu0 %v394
    %685 = vmatprep.subr.mxu0 0.0
    %686 = vmatpush1.msra.mxu0 %v397
    %687 = vmatprep.subr.mxu0 0.0
    %688 = vmatpush1.msra.mxu0 %v400
    %689 = vmatprep.subr.mxu0 0.0
    %690 = vmatpush1.msra.mxu0 %v403
    %691 = vmatprep.subr.mxu0 0.0
    %692 = vmatpush1.msra.mxu0 %v406
    %693 = vmatprep.subr.mxu0 0.0
    %694 = vmatpush1.msra.mxu0 %v409
    %695 = vmatprep.subr.mxu0 0.0
    %696 = vmatpush1.msra.mxu0 %v412
    %697 = vmatprep.subr.mxu0 0.0
    %698 = vmatpush1.msra.mxu0 %v415
    %699 = vmatprep.subr.mxu0 0.0
    %700 = vmatpush1.msra.mxu0 %v418
    %701 = vmatprep.subr.mxu0 0.0
    %702 = vmatpush1.msra.mxu0 %v421
    %703 = vmatprep.subr.mxu0 0.0
    %704 = vmatpush1.msra.mxu0 %v424
    %705 = vmatprep.subr.mxu0 0.0
    %706 = vmatpush1.msra.mxu0 %v427
    %707 = vmatprep.subr.mxu0 0.0
    %708 = vmatpush1.msra.mxu0 %v430
    %709 = vmatprep.subr.mxu0 0.0
    %710 = vmatpush1.msra.mxu0 %v433
    %711 = vmatprep.subr.mxu0 0.0
    %712 = vmatpush1.msra.mxu0 0.0
    %713 = vmatprep.subr.mxu0 0.0
    %714 = vmatpush1.msra.mxu0 0.0
    %715 = vmatprep.subr.mxu0 0.0
    %716 = vmatpush1.msra.mxu0 0.0
    %717 = vmatprep.subr.mxu0 0.0
    %718 = vmatpush1.msra.mxu0 0.0
    %719 = vmatprep.subr.mxu0 0.0
    %720 = vmatpush1.msra.mxu0 0.0
    %721 = vmatprep.subr.mxu0 0.0
    %722 = vmatpush1.msra.mxu0 0.0
    %723 = vmatprep.subr.mxu0 0.0
    %724 = vmatpush1.msra.mxu0 0.0
    %725 = vmatprep.subr.mxu0 0.0
    %726 = vmatpush1.msra.mxu0 0.0
    %727 = vmatprep.subr.mxu0 0.0
    %728 = vmatpush1.msra.mxu0 0.0
    %729 = vmatprep.subr.mxu0 0.0
    %730 = vmatpush1.msra.mxu0 0.0
    %731 = vmatprep.subr.mxu0 0.0
    %732 = vmatpush1.msra.mxu0 0.0
    %733 = vmatprep.subr.mxu0 0.0
    %734 = vmatpush1.msra.mxu0 0.0
    %735 = vmatprep.subr.mxu0 0.0
    %736 = vmatpush1.msra.mxu0 0.0
    %737 = vmatprep.subr.mxu0 0.0
    %738 = vmatpush1.msra.mxu0 0.0
    %739 = vmatprep.subr.mxu0 0.0
    %740 = vmatpush1.msra.mxu0 0.0
    %741 = vmatprep.subr.mxu0 0.0
    %742 = vmatpush1.msra.mxu0 0.0
    %743 = vmatprep.mubr.f32.mxu0 0.0
    %744 = vmatmul.mubr.f32.gmra.mrb[0].mxu0 %v602
    %v745 = vpop.f32.mrb[0].mxu0
    %v746 = vadd.f32 0.0, %v745
    %v747 = vpop.f32.mrb[0].mxu0
    %748 = vdwg.mxu0
    %v749 = vadd.f32 %v605, %v675
    %v750 = vmul.f32 %v749, 0.5
    %v751 = vtanh.pop %v750
    %v752 = vmul.f32 %v751, 0.5
    %v753 = vadd.f32 %v752, 0.5
    %v754 = vadd.f32 %v606, %v677
    %v755 = vmul.f32 %v754, 0.5
    %v756 = vtanh.pop %v755
    %v757 = vmul.f32 %v756, 0.5
    %v758 = vadd.f32 %v757, 0.5
    %v759 = vadd.f32 %v746, %v439
    %v760 = vmul.f32 %v753, %v759
    %v761 = vadd.f32 %v607, %v760
    %v762 = vtanh.pop %v761
    %v763 = vsub.f32 %v602, %v762
    %v764 = vmul.f32 %v758, %v763
    %v765 = vadd.f32 %v762, %v764
    %s766 = scalar_lea.vmem [#allocation10], 8
    %767 = vst [vmem:[%s766] sm:$0xff] %v765
    %s768 = scalar_lea.vmem [#allocation2], 48
    %v769 = vld [vmem:[%s768] sm:$0xff]
    %v770 = vld [vmem:[%s768 + $0x8] sm:$0xff]
    %v771 = vld [vmem:[%s768 + $0x10] sm:$0xff]
    %772 = vmatprep.subr.mxu0 %v387
    %773 = vmatpush1.msra.mxu0 %v386
    %774 = vmatprep.subr.mxu0 %v390
    %775 = vmatpush1.msra.mxu0 %v389
    %776 = vmatprep.subr.mxu0 %v393
    %777 = vmatpush1.msra.mxu0 %v392
    %778 = vmatprep.subr.mxu0 %v396
    %779 = vmatpush1.msra.mxu0 %v395
    %780 = vmatprep.subr.mxu0 %v399
    %781 = vmatpush1.msra.mxu0 %v398
    %782 = vmatprep.subr.mxu0 %v402
    %783 = vmatpush1.msra.mxu0 %v401
    %784 = vmatprep.subr.mxu0 %v405
    %785 = vmatpush1.msra.mxu0 %v404
    %786 = vmatprep.subr.mxu0 %v408
    %787 = vmatpush1.msra.mxu0 %v407
    %788 = vmatprep.subr.mxu0 %v411
    %789 = vmatpush1.msra.mxu0 %v410
    %790 = vmatprep.subr.mxu0 %v414
    %791 = vmatpush1.msra.mxu0 %v413
    %792 = vmatprep.subr.mxu0 %v417
    %793 = vmatpush1.msra.mxu0 %v416
    %794 = vmatprep.subr.mxu0 %v420
    %795 = vmatpush1.msra.mxu0 %v419
    %796 = vmatprep.subr.mxu0 %v423
    %797 = vmatpush1.msra.mxu0 %v422
    %798 = vmatprep.subr.mxu0 %v426
    %799 = vmatpush1.msra.mxu0 %v425
    %800 = vmatprep.subr.mxu0 %v429
    %801 = vmatpush1.msra.mxu0 %v428
    %802 = vmatprep.subr.mxu0 %v432
    %803 = vmatpush1.msra.mxu0 %v431
    %804 = vmatprep.subr.mxu0 0.0
    %805 = vmatpush1.msra.mxu0 0.0
    %806 = vmatprep.subr.mxu0 0.0
    %807 = vmatpush1.msra.mxu0 0.0
    %808 = vmatprep.subr.mxu0 0.0
    %809 = vmatpush1.msra.mxu0 0.0
    %810 = vmatprep.subr.mxu0 0.0
    %811 = vmatpush1.msra.mxu0 0.0
    %812 = vmatprep.subr.mxu0 0.0
    %813 = vmatpush1.msra.mxu0 0.0
    %814 = vmatprep.subr.mxu0 0.0
    %815 = vmatpush1.msra.mxu0 0.0
    %816 = vmatprep.subr.mxu0 0.0
    %817 = vmatpush1.msra.mxu0 0.0
    %818 = vmatprep.subr.mxu0 0.0
    %819 = vmatpush1.msra.mxu0 0.0
    %820 = vmatprep.subr.mxu0 0.0
    %821 = vmatpush1.msra.mxu0 0.0
    %822 = vmatprep.subr.mxu0 0.0
    %823 = vmatpush1.msra.mxu0 0.0
    %824 = vmatprep.subr.mxu0 0.0
    %825 = vmatpush1.msra.mxu0 0.0
    %826 = vmatprep.subr.mxu0 0.0
    %827 = vmatpush1.msra.mxu0 0.0
    %828 = vmatprep.subr.mxu0 0.0
    %829 = vmatpush1.msra.mxu0 0.0
    %830 = vmatprep.subr.mxu0 0.0
    %831 = vmatpush1.msra.mxu0 0.0
    %832 = vmatprep.subr.mxu0 0.0
    %833 = vmatpush1.msra.mxu0 0.0
    %834 = vmatprep.subr.mxu0 0.0
    %835 = vmatpush1.msra.mxu0 0.0
    %836 = vmatprep.mubr.f32.mxu0 0.0
    %837 = vmatmul.mubr.f32.gmra.mrb[0].mxu0 %v765
    %v838 = vpop.f32.mrb[0].mxu0
    %v839 = vadd.f32 0.0, %v838
    %v840 = vpop.f32.mrb[0].mxu0
    %v841 = vadd.f32 0.0, %v840
    %842 = vdwg.mxu0
    %843 = vmatprep.subr.mxu0 0.0
    %844 = vmatpush1.msra.mxu0 %v388
    %845 = vmatprep.subr.mxu0 0.0
    %846 = vmatpush1.msra.mxu0 %v391
    %847 = vmatprep.subr.mxu0 0.0
    %848 = vmatpush1.msra.mxu0 %v394
    %849 = vmatprep.subr.mxu0 0.0
    %850 = vmatpush1.msra.mxu0 %v397
    %851 = vmatprep.subr.mxu0 0.0
    %852 = vmatpush1.msra.mxu0 %v400
    %853 = vmatprep.subr.mxu0 0.0
    %854 = vmatpush1.msra.mxu0 %v403
    %855 = vmatprep.subr.mxu0 0.0
    %856 = vmatpush1.msra.mxu0 %v406
    %857 = vmatprep.subr.mxu0 0.0
    %858 = vmatpush1.msra.mxu0 %v409
    %859 = vmatprep.subr.mxu0 0.0
    %860 = vmatpush1.msra.mxu0 %v412
    %861 = vmatprep.subr.mxu0 0.0
    %862 = vmatpush1.msra.mxu0 %v415
    %863 = vmatprep.subr.mxu0 0.0
    %864 = vmatpush1.msra.mxu0 %v418
    %865 = vmatprep.subr.mxu0 0.0
    %866 = vmatpush1.msra.mxu0 %v421
    %867 = vmatprep.subr.mxu0 0.0
    %868 = vmatpush1.msra.mxu0 %v424
    %869 = vmatprep.subr.mxu0 0.0
    %870 = vmatpush1.msra.mxu0 %v427
    %871 = vmatprep.subr.mxu0 0.0
    %872 = vmatpush1.msra.mxu0 %v430
    %873 = vmatprep.subr.mxu0 0.0
    %874 = vmatpush1.msra.mxu0 %v433
    %875 = vmatprep.subr.mxu0 0.0
    %876 = vmatpush1.msra.mxu0 0.0
    %877 = vmatprep.subr.mxu0 0.0
    %878 = vmatpush1.msra.mxu0 0.0
    %879 = vmatprep.subr.mxu0 0.0
    %880 = vmatpush1.msra.mxu0 0.0
    %881 = vmatprep.subr.mxu0 0.0
    %882 = vmatpush1.msra.mxu0 0.0
    %883 = vmatprep.subr.mxu0 0.0
    %884 = vmatpush1.msra.mxu0 0.0
    %885 = vmatprep.subr.mxu0 0.0
    %886 = vmatpush1.msra.mxu0 0.0
    %887 = vmatprep.subr.mxu0 0.0
    %888 = vmatpush1.msra.mxu0 0.0
    %889 = vmatprep.subr.mxu0 0.0
    %890 = vmatpush1.msra.mxu0 0.0
    %891 = vmatprep.subr.mxu0 0.0
    %892 = vmatpush1.msra.mxu0 0.0
    %893 = vmatprep.subr.mxu0 0.0
    %894 = vmatpush1.msra.mxu0 0.0
    %895 = vmatprep.subr.mxu0 0.0
    %896 = vmatpush1.msra.mxu0 0.0
    %897 = vmatprep.subr.mxu0 0.0
    %898 = vmatpush1.msra.mxu0 0.0
    %899 = vmatprep.subr.mxu0 0.0
    %900 = vmatpush1.msra.mxu0 0.0
    %901 = vmatprep.subr.mxu0 0.0
    %902 = vmatpush1.msra.mxu0 0.0
    %903 = vmatprep.subr.mxu0 0.0
    %904 = vmatpush1.msra.mxu0 0.0
    %905 = vmatprep.subr.mxu0 0.0
    %906 = vmatpush1.msra.mxu0 0.0
    %907 = vmatprep.mubr.f32.mxu0 0.0
    %908 = vmatmul.mubr.f32.gmra.mrb[0].mxu0 %v765
    %v909 = vpop.f32.mrb[0].mxu0
    %v910 = vadd.f32 0.0, %v909
    %v911 = vpop.f32.mrb[0].mxu0
    %912 = vdwg.mxu0
    %v913 = vadd.f32 %v769, %v839
    %v914 = vmul.f32 %v913, 0.5
    %v915 = vtanh.pop %v914
    %v916 = vmul.f32 %v915, 0.5
    %v917 = vadd.f32 %v916, 0.5
    %v918 = vadd.f32 %v770, %v841
    %v919 = vmul.f32 %v918, 0.5
    %v920 = vtanh.pop %v919
    %v921 = vmul.f32 %v920, 0.5
    %v922 = vadd.f32 %v921, 0.5
    %v923 = vadd.f32 %v910, %v439
    %v924 = vmul.f32 %v917, %v923
    %v925 = vadd.f32 %v771, %v924
    %v926 = vtanh.pop %v925
    %v927 = vsub.f32 %v765, %v926
    %v928 = vmul.f32 %v922, %v927
    %v929 = vadd.f32 %v926, %v928
    %s930 = scalar_lea.vmem [#allocation10], 16
    %931 = vst [vmem:[%s930] sm:$0xff] %v929
    %s932 = scalar_lea.vmem [#allocation2], 72
    %v933 = vld [vmem:[%s932] sm:$0xff]
    %v934 = vld [vmem:[%s932 + $0x8] sm:$0xff]
    %v935 = vld [vmem:[%s932 + $0x10] sm:$0xff]
    %936 = vmatprep.subr.mxu0 %v387
    %937 = vmatpush1.msra.mxu0 %v386
    %938 = vmatprep.subr.mxu0 %v390
    %939 = vmatpush1.msra.mxu0 %v389
    %940 = vmatprep.subr.mxu0 %v393
    %941 = vmatpush1.msra.mxu0 %v392
    %942 = vmatprep.subr.mxu0 %v396
    %943 = vmatpush1.msra.mxu0 %v395
    %944 = vmatprep.subr.mxu0 %v399
    %945 = vmatpush1.msra.mxu0 %v398
    %946 = vmatprep.subr.mxu0 %v402
    %947 = vmatpush1.msra.mxu0 %v401
    %948 = vmatprep.subr.mxu0 %v405
    %949 = vmatpush1.msra.mxu0 %v404
    %950 = vmatprep.subr.mxu0 %v408
    %951 = vmatpush1.msra.mxu0 %v407
    %952 = vmatprep.subr.mxu0 %v411
    %953 = vmatpush1.msra.mxu0 %v410
    %954 = vmatprep.subr.mxu0 %v414
    %955 = vmatpush1.msra.mxu0 %v413
    %956 = vmatprep.subr.mxu0 %v417
    %957 = vmatpush1.msra.mxu0 %v416
    %958 = vmatprep.subr.mxu0 %v420
    %959 = vmatpush1.msra.mxu0 %v419
    %960 = vmatprep.subr.mxu0 %v423
    %961 = vmatpush1.msra.mxu0 %v422
    %962 = vmatprep.subr.mxu0 %v426
    %963 = vmatpush1.msra.mxu0 %v425
    %964 = vmatprep.subr.mxu0 %v429
    %965 = vmatpush1.msra.mxu0 %v428
    %966 = vmatprep.subr.mxu0 %v432
    %967 = vmatpush1.msra.mxu0 %v431
    %968 = vmatprep.subr.mxu0 0.0
    %969 = vmatpush1.msra.mxu0 0.0
    %970 = vmatprep.subr.mxu0 0.0
    %971 = vmatpush1.msra.mxu0 0.0
    %972 = vmatprep.subr.mxu0 0.0
    %973 = vmatpush1.msra.mxu0 0.0
    %974 = vmatprep.subr.mxu0 0.0
    %975 = vmatpush1.msra.mxu0 0.0
    %976 = vmatprep.subr.mxu0 0.0
    %977 = vmatpush1.msra.mxu0 0.0
    %978 = vmatprep.subr.mxu0 0.0
    %979 = vmatpush1.msra.mxu0 0.0
    %980 = vmatprep.subr.mxu0 0.0
    %981 = vmatpush1.msra.mxu0 0.0
    %982 = vmatprep.subr.mxu0 0.0
    %983 = vmatpush1.msra.mxu0 0.0
    %984 = vmatprep.subr.mxu0 0.0
    %985 = vmatpush1.msra.mxu0 0.0
    %986 = vmatprep.subr.mxu0 0.0
    %987 = vmatpush1.msra.mxu0 0.0
    %988 = vmatprep.subr.mxu0 0.0
    %989 = vmatpush1.msra.mxu0 0.0
    %990 = vmatprep.subr.mxu0 0.0
    %991 = vmatpush1.msra.mxu0 0.0
    %992 = vmatprep.subr.mxu0 0.0
    %993 = vmatpush1.msra.mxu0 0.0
    %994 = vmatprep.subr.mxu0 0.0
    %995 = vmatpush1.msra.mxu0 0.0
    %996 = vmatprep.subr.mxu0 0.0
    %997 = vmatpush1.msra.mxu0 0.0
    %998 = vmatprep.subr.mxu0 0.0
    %999 = vmatpush1.msra.mxu0 0.0
    %1000 = vmatprep.mubr.f32.mxu0 0.0
    %1001 = vmatmul.mubr.f32.gmra.mrb[0].mxu0 %v929
    %v1002 = vpop.f32.mrb[0].mxu0
    %v1003 = vadd.f32 0.0, %v1002
    %v1004 = vpop.f32.mrb[0].mxu0
    %v1005 = vadd.f32 0.0, %v1004
    %1006 = vdwg.mxu0
    %1007 = vmatprep.subr.mxu0 0.0
    %1008 = vmatpush1.msra.mxu0 %v388
    %1009 = vmatprep.subr.mxu0 0.0
    %1010 = vmatpush1.msra.mxu0 %v391
    %1011 = vmatprep.subr.mxu0 0.0
    %1012 = vmatpush1.msra.mxu0 %v394
    %1013 = vmatprep.subr.mxu0 0.0
    %1014 = vmatpush1.msra.mxu0 %v397
    %1015 = vmatprep.subr.mxu0 0.0
    %1016 = vmatpush1.msra.mxu0 %v400
    %1017 = vmatprep.subr.mxu0 0.0
    %1018 = vmatpush1.msra.mxu0 %v403
    %1019 = vmatprep.subr.mxu0 0.0
    %1020 = vmatpush1.msra.mxu0 %v406
    %1021 = vmatprep.subr.mxu0 0.0
    %1022 = vmatpush1.msra.mxu0 %v409
    %1023 = vmatprep.subr.mxu0 0.0
    %1024 = vmatpush1.msra.mxu0 %v412
    %1025 = vmatprep.subr.mxu0 0.0
    %1026 = vmatpush1.msra.mxu0 %v415
    %1027 = vmatprep.subr.mxu0 0.0
    %1028 = vmatpush1.msra.mxu0 %v418
    %1029 = vmatprep.subr.mxu0 0.0
    %1030 = vmatpush1.msra.mxu0 %v421
    %1031 = vmatprep.subr.mxu0 0.0
    %1032 = vmatpush1.msra.mxu0 %v424
    %1033 = vmatprep.subr.mxu0 0.0
    %1034 = vmatpush1.msra.mxu0 %v427
    %1035 = vmatprep.subr.mxu0 0.0
    %1036 = vmatpush1.msra.mxu0 %v430
    %1037 = vmatprep.subr.mxu0 0.0
    %1038 = vmatpush1.msra.mxu0 %v433
    %1039 = vmatprep.subr.mxu0 0.0
    %1040 = vmatpush1.msra.mxu0 0.0
    %1041 = vmatprep.subr.mxu0 0.0
    %1042 = vmatpush1.msra.mxu0 0.0
    %1043 = vmatprep.subr.mxu0 0.0
    %1044 = vmatpush1.msra.mxu0 0.0
    %1045 = vmatprep.subr.mxu0 0.0
    %1046 = vmatpush1.msra.mxu0 0.0
    %1047 = vmatprep.subr.mxu0 0.0
    %1048 = vmatpush1.msra.mxu0 0.0
    %1049 = vmatprep.subr.mxu0 0.0
    %1050 = vmatpush1.msra.mxu0 0.0
    %1051 = vmatprep.subr.mxu0 0.0
    %1052 = vmatpush1.msra.mxu0 0.0
    %1053 = vmatprep.subr.mxu0 0.0
    %1054 = vmatpush1.msra.mxu0 0.0
    %1055 = vmatprep.subr.mxu0 0.0
    %1056 = vmatpush1.msra.mxu0 0.0
    %1057 = vmatprep.subr.mxu0 0.0
    %1058 = vmatpush1.msra.mxu0 0.0
    %1059 = vmatprep.subr.mxu0 0.0
    %1060 = vmatpush1.msra.mxu0 0.0
    %1061 = vmatprep.subr.mxu0 0.0
    %1062 = vmatpush1.msra.mxu0 0.0
    %1063 = vmatprep.subr.mxu0 0.0
    %1064 = vmatpush1.msra.mxu0 0.0
    %1065 = vmatprep.subr.mxu0 0.0
    %1066 = vmatpush1.msra.mxu0 0.0
    %1067 = vmatprep.subr.mxu0 0.0
    %1068 = vmatpush1.msra.mxu0 0.0
    %1069 = vmatprep.subr.mxu0 0.0
    %1070 = vmatpush1.msra.mxu0 0.0
    %1071 = vmatprep.mubr.f32.mxu0 0.0
    %1072 = vmatmul.mubr.f32.gmra.mrb[0].mxu0 %v929
    %v1073 = vpop.f32.mrb[0].mxu0
    %v1074 = vadd.f32 0.0, %v1073
    %v1075 = vpop.f32.mrb[0].mxu0
    %1076 = vdwg.mxu0
    %v1077 = vadd.f32 %v933, %v1003
    %v1078 = vmul.f32 %v1077, 0.5
    %v1079 = vtanh.pop %v1078
    %v1080 = vmul.f32 %v1079, 0.5
    %v1081 = vadd.f32 %v1080, 0.5
    %v1082 = vadd.f32 %v934, %v1005
    %v1083 = vmul.f32 %v1082, 0.5
    %v1084 = vtanh.pop %v1083
    %v1085 = vmul.f32 %v1084, 0.5
    %v1086 = vadd.f32 %v1085, 0.5
    %v1087 = vadd.f32 %v1074, %v439
    %v1088 = vmul.f32 %v1081, %v1087
    %v1089 = vadd.f32 %v935, %v1088
    %v1090 = vtanh.pop %v1089
    %v1091 = vsub.f32 %v929, %v1090
    %v1092 = vmul.f32 %v1086, %v1091
    %v1093 = vadd.f32 %v1090, %v1092
    %s1094 = scalar_lea.vmem [#allocation10], 24
    %1095 = vst [vmem:[%s1094] sm:$0xff] %v1093
    %s1096 = scalar_lea.vmem [#allocation2], 96
    %v1097 = vld [vmem:[%s1096] sm:$0xff]
    %v1098 = vld [vmem:[%s1096 + $0x8] sm:$0xff]
    %v1099 = vld [vmem:[%s1096 + $0x10] sm:$0xff]
    %1100 = vmatprep.subr.mxu0 %v387
    %1101 = vmatpush1.msra.mxu0 %v386
    %1102 = vmatprep.subr.mxu0 %v390
    %1103 = vmatpush1.msra.mxu0 %v389
    %1104 = vmatprep.subr.mxu0 %v393
    %1105 = vmatpush1.msra.mxu0 %v392
    %1106 = vmatprep.subr.mxu0 %v396
    %1107 = vmatpush1.msra.mxu0 %v395
    %1108 = vmatprep.subr.mxu0 %v399
    %1109 = vmatpush1.msra.mxu0 %v398
    %1110 = vmatprep.subr.mxu0 %v402
    %1111 = vmatpush1.msra.mxu0 %v401
    %1112 = vmatprep.subr.mxu0 %v405
    %1113 = vmatpush1.msra.mxu0 %v404
    %1114 = vmatprep.subr.mxu0 %v408
    %1115 = vmatpush1.msra.mxu0 %v407
    %1116 = vmatprep.subr.mxu0 %v411
    %1117 = vmatpush1.msra.mxu0 %v410
    %1118 = vmatprep.subr.mxu0 %v414
    %1119 = vmatpush1.msra.mxu0 %v413
    %1120 = vmatprep.subr.mxu0 %v417
    %1121 = vmatpush1.msra.mxu0 %v416
    %1122 = vmatprep.subr.mxu0 %v420
    %1123 = vmatpush1.msra.mxu0 %v419
    %1124 = vmatprep.subr.mxu0 %v423
    %1125 = vmatpush1.msra.mxu0 %v422
    %1126 = vmatprep.subr.mxu0 %v426
    %1127 = vmatpush1.msra.mxu0 %v425
    %1128 = vmatprep.subr.mxu0 %v429
    %1129 = vmatpush1.msra.mxu0 %v428
    %1130 = vmatprep.subr.mxu0 %v432
    %1131 = vmatpush1.msra.mxu0 %v431
    %1132 = vmatprep.subr.mxu0 0.0
    %1133 = vmatpush1.msra.mxu0 0.0
    %1134 = vmatprep.subr.mxu0 0.0
    %1135 = vmatpush1.msra.mxu0 0.0
    %1136 = vmatprep.subr.mxu0 0.0
    %1137 = vmatpush1.msra.mxu0 0.0
    %1138 = vmatprep.subr.mxu0 0.0
    %1139 = vmatpush1.msra.mxu0 0.0
    %1140 = vmatprep.subr.mxu0 0.0
    %1141 = vmatpush1.msra.mxu0 0.0
    %1142 = vmatprep.subr.mxu0 0.0
    %1143 = vmatpush1.msra.mxu0 0.0
    %1144 = vmatprep.subr.mxu0 0.0
    %1145 = vmatpush1.msra.mxu0 0.0
    %1146 = vmatprep.subr.mxu0 0.0
    %1147 = vmatpush1.msra.mxu0 0.0
    %1148 = vmatprep.subr.mxu0 0.0
    %1149 = vmatpush1.msra.mxu0 0.0
    %1150 = vmatprep.subr.mxu0 0.0
    %1151 = vmatpush1.msra.mxu0 0.0
    %1152 = vmatprep.subr.mxu0 0.0
    %1153 = vmatpush1.msra.mxu0 0.0
    %1154 = vmatprep.subr.mxu0 0.0
    %1155 = vmatpush1.msra.mxu0 0.0
    %1156 = vmatprep.subr.mxu0 0.0
    %1157 = vmatpush1.msra.mxu0 0.0
    %1158 = vmatprep.subr.mxu0 0.0
    %1159 = vmatpush1.msra.mxu0 0.0
    %1160 = vmatprep.subr.mxu0 0.0
    %1161 = vmatpush1.msra.mxu0 0.0
    %1162 = vmatprep.subr.mxu0 0.0
    %1163 = vmatpush1.msra.mxu0 0.0
    %1164 = vmatprep.mubr.f32.mxu0 0.0
    %1165 = vmatmul.mubr.f32.gmra.mrb[0].mxu0 %v1093
    %v1166 = vpop.f32.mrb[0].mxu0
    %v1167 = vadd.f32 0.0, %v1166
    %v1168 = vpop.f32.mrb[0].mxu0
    %v1169 = vadd.f32 0.0, %v1168
    %1170 = vdwg.mxu0
    %1171 = vmatprep.subr.mxu0 0.0
    %1172 = vmatpush1.msra.mxu0 %v388
    %1173 = vmatprep.subr.mxu0 0.0
    %1174 = vmatpush1.msra.mxu0 %v391
    %1175 = vmatprep.subr.mxu0 0.0
    %1176 = vmatpush1.msra.mxu0 %v394
    %1177 = vmatprep.subr.mxu0 0.0
    %1178 = vmatpush1.msra.mxu0 %v397
    %1179 = vmatprep.subr.mxu0 0.0
    %1180 = vmatpush1.msra.mxu0 %v400
    %1181 = vmatprep.subr.mxu0 0.0
    %1182 = vmatpush1.msra.mxu0 %v403
    %1183 = vmatprep.subr.mxu0 0.0
    %1184 = vmatpush1.msra.mxu0 %v406
    %1185 = vmatprep.subr.mxu0 0.0
    %1186 = vmatpush1.msra.mxu0 %v409
    %1187 = vmatprep.subr.mxu0 0.0
    %1188 = vmatpush1.msra.mxu0 %v412
    %1189 = vmatprep.subr.mxu0 0.0
    %1190 = vmatpush1.msra.mxu0 %v415
    %1191 = vmatprep.subr.mxu0 0.0
    %1192 = vmatpush1.msra.mxu0 %v418
    %1193 = vmatprep.subr.mxu0 0.0
    %1194 = vmatpush1.msra.mxu0 %v421
    %1195 = vmatprep.subr.mxu0 0.0
    %1196 = vmatpush1.msra.mxu0 %v424
    %1197 = vmatprep.subr.mxu0 0.0
    %1198 = vmatpush1.msra.mxu0 %v427
    %1199 = vmatprep.subr.mxu0 0.0
    %1200 = vmatpush1.msra.mxu0 %v430
    %1201 = vmatprep.subr.mxu0 0.0
    %1202 = vmatpush1.msra.mxu0 %v433
    %1203 = vmatprep.subr.mxu0 0.0
    %1204 = vmatpush1.msra.mxu0 0.0
    %1205 = vmatprep.subr.mxu0 0.0
    %1206 = vmatpush1.msra.mxu0 0.0
    %1207 = vmatprep.subr.mxu0 0.0
    %1208 = vmatpush1.msra.mxu0 0.0
    %1209 = vmatprep.subr.mxu0 0.0
    %1210 = vmatpush1.msra.mxu0 0.0
    %1211 = vmatprep.subr.mxu0 0.0
    %1212 = vmatpush1.msra.mxu0 0.0
    %1213 = vmatprep.subr.mxu0 0.0
    %1214 = vmatpush1.msra.mxu0 0.0
    %1215 = vmatprep.subr.mxu0 0.0
    %1216 = vmatpush1.msra.mxu0 0.0
    %1217 = vmatprep.subr.mxu0 0.0
    %1218 = vmatpush1.msra.mxu0 0.0
    %1219 = vmatprep.subr.mxu0 0.0
    %1220 = vmatpush1.msra.mxu0 0.0
    %1221 = vmatprep.subr.mxu0 0.0
    %1222 = vmatpush1.msra.mxu0 0.0
    %1223 = vmatprep.subr.mxu0 0.0
    %1224 = vmatpush1.msra.mxu0 0.0
    %1225 = vmatprep.subr.mxu0 0.0
    %1226 = vmatpush1.msra.mxu0 0.0
    %1227 = vmatprep.subr.mxu0 0.0
    %1228 = vmatpush1.msra.mxu0 0.0
    %1229 = vmatprep.subr.mxu0 0.0
    %1230 = vmatpush1.msra.mxu0 0.0
    %1231 = vmatprep.subr.mxu0 0.0
    %1232 = vmatpush1.msra.mxu0 0.0
    %1233 = vmatprep.subr.mxu0 0.0
    %1234 = vmatpush1.msra.mxu0 0.0
    %1235 = vmatprep.mubr.f32.mxu0 0.0
    %1236 = vmatmul.mubr.f32.gmra.mrb[0].mxu0 %v1093
    %v1237 = vpop.f32.mrb[0].mxu0
    %v1238 = vadd.f32 0.0, %v1237
    %v1239 = vpop.f32.mrb[0].mxu0
    %1240 = vdwg.mxu0
    %v1241 = vadd.f32 %v1097, %v1167
    %v1242 = vmul.f32 %v1241, 0.5
    %v1243 = vtanh.pop %v1242
    %v1244 = vmul.f32 %v1243, 0.5
    %v1245 = vadd.f32 %v1244, 0.5
    %v1246 = vadd.f32 %v1098, %v1169
    %v1247 = vmul.f32 %v1246, 0.5
    %v1248 = vtanh.pop %v1247
    %v1249 = vmul.f32 %v1248, 0.5
    %v1250 = vadd.f32 %v1249, 0.5
    %v1251 = vadd.f32 %v1238, %v439
    %v1252 = vmul.f32 %v1245, %v1251
    %v1253 = vadd.f32 %v1099, %v1252
    %v1254 = vtanh.pop %v1253
    %v1255 = vsub.f32 %v1093, %v1254
    %v1256 = vmul.f32 %v1250, %v1255
    %v1257 = vadd.f32 %v1254, %v1256
    %s1258 = scalar_lea.vmem [#allocation10], 32
    %1259 = vst [vmem:[%s1258] sm:$0xff] %v1257
    %s1260 = scalar_lea.vmem [#allocation2], 120
    %v1261 = vld [vmem:[%s1260] sm:$0xff]
    %v1262 = vld [vmem:[%s1260 + $0x8] sm:$0xff]
    %v1263 = vld [vmem:[%s1260 + $0x10] sm:$0xff]
    %1264 = vmatprep.subr.mxu0 %v387
    %1265 = vmatpush1.msra.mxu0 %v386
    %1266 = vmatprep.subr.mxu0 %v390
    %1267 = vmatpush1.msra.mxu0 %v389
    %1268 = vmatprep.subr.mxu0 %v393
    %1269 = vmatpush1.msra.mxu0 %v392
    %1270 = vmatprep.subr.mxu0 %v396
    %1271 = vmatpush1.msra.mxu0 %v395
    %1272 = vmatprep.subr.mxu0 %v399
    %1273 = vmatpush1.msra.mxu0 %v398
    %1274 = vmatprep.subr.mxu0 %v402
    %1275 = vmatpush1.msra.mxu0 %v401
    %1276 = vmatprep.subr.mxu0 %v405
    %1277 = vmatpush1.msra.mxu0 %v404
    %1278 = vmatprep.subr.mxu0 %v408
    %1279 = vmatpush1.msra.mxu0 %v407
    %1280 = vmatprep.subr.mxu0 %v411
    %1281 = vmatpush1.msra.mxu0 %v410
    %1282 = vmatprep.subr.mxu0 %v414
    %1283 = vmatpush1.msra.mxu0 %v413
    %1284 = vmatprep.subr.mxu0 %v417
    %1285 = vmatpush1.msra.mxu0 %v416
    %1286 = vmatprep.subr.mxu0 %v420
    %1287 = vmatpush1.msra.mxu0 %v419
    %1288 = vmatprep.subr.mxu0 %v423
    %1289 = vmatpush1.msra.mxu0 %v422
    %1290 = vmatprep.subr.mxu0 %v426
    %1291 = vmatpush1.msra.mxu0 %v425
    %1292 = vmatprep.subr.mxu0 %v429
    %1293 = vmatpush1.msra.mxu0 %v428
    %1294 = vmatprep.subr.mxu0 %v432
    %1295 = vmatpush1.msra.mxu0 %v431
    %1296 = vmatprep.subr.mxu0 0.0
    %1297 = vmatpush1.msra.mxu0 0.0
    %1298 = vmatprep.subr.mxu0 0.0
    %1299 = vmatpush1.msra.mxu0 0.0
    %1300 = vmatprep.subr.mxu0 0.0
    %1301 = vmatpush1.msra.mxu0 0.0
    %1302 = vmatprep.subr.mxu0 0.0
    %1303 = vmatpush1.msra.mxu0 0.0
    %1304 = vmatprep.subr.mxu0 0.0
    %1305 = vmatpush1.msra.mxu0 0.0
    %1306 = vmatprep.subr.mxu0 0.0
    %1307 = vmatpush1.msra.mxu0 0.0
    %1308 = vmatprep.subr.mxu0 0.0
    %1309 = vmatpush1.msra.mxu0 0.0
    %1310 = vmatprep.subr.mxu0 0.0
    %1311 = vmatpush1.msra.mxu0 0.0
    %1312 = vmatprep.subr.mxu0 0.0
    %1313 = vmatpush1.msra.mxu0 0.0
    %1314 = vmatprep.subr.mxu0 0.0
    %1315 = vmatpush1.msra.mxu0 0.0
    %1316 = vmatprep.subr.mxu0 0.0
    %1317 = vmatpush1.msra.mxu0 0.0
    %1318 = vmatprep.subr.mxu0 0.0
    %1319 = vmatpush1.msra.mxu0 0.0
    %1320 = vmatprep.subr.mxu0 0.0
    %1321 = vmatpush1.msra.mxu0 0.0
    %1322 = vmatprep.subr.mxu0 0.0
    %1323 = vmatpush1.msra.mxu0 0.0
    %1324 = vmatprep.subr.mxu0 0.0
    %1325 = vmatpush1.msra.mxu0 0.0
    %1326 = vmatprep.subr.mxu0 0.0
    %1327 = vmatpush1.msra.mxu0 0.0
    %1328 = vmatprep.mubr.f32.mxu0 0.0
    %1329 = vmatmul.mubr.f32.gmra.mrb[0].mxu0 %v1257
    %v1330 = vpop.f32.mrb[0].mxu0
    %v1331 = vadd.f32 0.0, %v1330
    %v1332 = vpop.f32.mrb[0].mxu0
    %v1333 = vadd.f32 0.0, %v1332
    %1334 = vdwg.mxu0
    %1335 = vmatprep.subr.mxu0 0.0
    %1336 = vmatpush1.msra.mxu0 %v388
    %1337 = vmatprep.subr.mxu0 0.0
    %1338 = vmatpush1.msra.mxu0 %v391
    %1339 = vmatprep.subr.mxu0 0.0
    %1340 = vmatpush1.msra.mxu0 %v394
    %1341 = vmatprep.subr.mxu0 0.0
    %1342 = vmatpush1.msra.mxu0 %v397
    %1343 = vmatprep.subr.mxu0 0.0
    %1344 = vmatpush1.msra.mxu0 %v400
    %1345 = vmatprep.subr.mxu0 0.0
    %1346 = vmatpush1.msra.mxu0 %v403
    %1347 = vmatprep.subr.mxu0 0.0
    %1348 = vmatpush1.msra.mxu0 %v406
    %1349 = vmatprep.subr.mxu0 0.0
    %1350 = vmatpush1.msra.mxu0 %v409
    %1351 = vmatprep.subr.mxu0 0.0
    %1352 = vmatpush1.msra.mxu0 %v412
    %1353 = vmatprep.subr.mxu0 0.0
    %1354 = vmatpush1.msra.mxu0 %v415
    %1355 = vmatprep.subr.mxu0 0.0
    %1356 = vmatpush1.msra.mxu0 %v418
    %1357 = vmatprep.subr.mxu0 0.0
    %1358 = vmatpush1.msra.mxu0 %v421
    %1359 = vmatprep.subr.mxu0 0.0
    %1360 = vmatpush1.msra.mxu0 %v424
    %1361 = vmatprep.subr.mxu0 0.0
    %1362 = vmatpush1.msra.mxu0 %v427
    %1363 = vmatprep.subr.mxu0 0.0
    %1364 = vmatpush1.msra.mxu0 %v430
    %1365 = vmatprep.subr.mxu0 0.0
    %1366 = vmatpush1.msra.mxu0 %v433
    %1367 = vmatprep.subr.mxu0 0.0
    %1368 = vmatpush1.msra.mxu0 0.0
    %1369 = vmatprep.subr.mxu0 0.0
    %1370 = vmatpush1.msra.mxu0 0.0
    %1371 = vmatprep.subr.mxu0 0.0
    %1372 = vmatpush1.msra.mxu0 0.0
    %1373 = vmatprep.subr.mxu0 0.0
    %1374 = vmatpush1.msra.mxu0 0.0
    %1375 = vmatprep.subr.mxu0 0.0
    %1376 = vmatpush1.msra.mxu0 0.0
    %1377 = vmatprep.subr.mxu0 0.0
    %1378 = vmatpush1.msra.mxu0 0.0
    %1379 = vmatprep.subr.mxu0 0.0
    %1380 = vmatpush1.msra.mxu0 0.0
    %1381 = vmatprep.subr.mxu0 0.0
    %1382 = vmatpush1.msra.mxu0 0.0
    %1383 = vmatprep.subr.mxu0 0.0
    %1384 = vmatpush1.msra.mxu0 0.0
    %1385 = vmatprep.subr.mxu0 0.0
    %1386 = vmatpush1.msra.mxu0 0.0
    %1387 = vmatprep.subr.mxu0 0.0
    %1388 = vmatpush1.msra.mxu0 0.0
    %1389 = vmatprep.subr.mxu0 0.0
    %1390 = vmatpush1.msra.mxu0 0.0
    %1391 = vmatprep.subr.mxu0 0.0
    %1392 = vmatpush1.msra.mxu0 0.0
    %1393 = vmatprep.subr.mxu0 0.0
    %1394 = vmatpush1.msra.mxu0 0.0
    %1395 = vmatprep.subr.mxu0 0.0
    %1396 = vmatpush1.msra.mxu0 0.0
    %1397 = vmatprep.subr.mxu0 0.0
    %1398 = vmatpush1.msra.mxu0 0.0
    %1399 = vmatprep.mubr.f32.mxu0 0.0
    %1400 = vmatmul.mubr.f32.gmra.mrb[0].mxu0 %v1257
    %v1401 = vpop.f32.mrb[0].mxu0
    %v1402 = vadd.f32 0.0, %v1401
    %v1403 = vpop.f32.mrb[0].mxu0
    %1404 = vdwg.mxu0
    %v1405 = vadd.f32 %v1261, %v1331
    %v1406 = vmul.f32 %v1405, 0.5
    %v1407 = vtanh.pop %v1406
    %v1408 = vmul.f32 %v1407, 0.5
    %v1409 = vadd.f32 %v1408, 0.5
    %v1410 = vadd.f32 %v1262, %v1333
    %v1411 = vmul.f32 %v1410, 0.5
    %v1412 = vtanh.pop %v1411
    %v1413 = vmul.f32 %v1412, 0.5
    %v1414 = vadd.f32 %v1413, 0.5
    %v1415 = vadd.f32 %v1402, %v439
    %v1416 = vmul.f32 %v1409, %v1415
    %v1417 = vadd.f32 %v1263, %v1416
    %v1418 = vtanh.pop %v1417
    %v1419 = vsub.f32 %v1257, %v1418
    %v1420 = vmul.f32 %v1414, %v1419
    %v1421 = vadd.f32 %v1418, %v1420
    %s1422 = scalar_lea.vmem [#allocation10], 40
    %1423 = vst [vmem:[%s1422] sm:$0xff] %v1421
    %s1424 = scalar_lea.vmem [#allocation2], 144
    %v1425 = vld [vmem:[%s1424] sm:$0xff]
    %v1426 = vld [vmem:[%s1424 + $0x8] sm:$0xff]
    %v1427 = vld [vmem:[%s1424 + $0x10] sm:$0xff]
    %1428 = vmatprep.subr.mxu0 %v387
    %1429 = vmatpush1.msra.mxu0 %v386
    %1430 = vmatprep.subr.mxu0 %v390
    %1431 = vmatpush1.msra.mxu0 %v389
    %1432 = vmatprep.subr.mxu0 %v393
    %1433 = vmatpush1.msra.mxu0 %v392
    %1434 = vmatprep.subr.mxu0 %v396
    %1435 = vmatpush1.msra.mxu0 %v395
    %1436 = vmatprep.subr.mxu0 %v399
    %1437 = vmatpush1.msra.mxu0 %v398
    %1438 = vmatprep.subr.mxu0 %v402
    %1439 = vmatpush1.msra.mxu0 %v401
    %1440 = vmatprep.subr.mxu0 %v405
    %1441 = vmatpush1.msra.mxu0 %v404
    %1442 = vmatprep.subr.mxu0 %v408
    %1443 = vmatpush1.msra.mxu0 %v407
    %1444 = vmatprep.subr.mxu0 %v411
    %1445 = vmatpush1.msra.mxu0 %v410
    %1446 = vmatprep.subr.mxu0 %v414
    %1447 = vmatpush1.msra.mxu0 %v413
    %1448 = vmatprep.subr.mxu0 %v417
    %1449 = vmatpush1.msra.mxu0 %v416
    %1450 = vmatprep.subr.mxu0 %v420
    %1451 = vmatpush1.msra.mxu0 %v419
    %1452 = vmatprep.subr.mxu0 %v423
    %1453 = vmatpush1.msra.mxu0 %v422
    %1454 = vmatprep.subr.mxu0 %v426
    %1455 = vmatpush1.msra.mxu0 %v425
    %1456 = vmatprep.subr.mxu0 %v429
    %1457 = vmatpush1.msra.mxu0 %v428
    %1458 = vmatprep.subr.mxu0 %v432
    %1459 = vmatpush1.msra.mxu0 %v431
    %1460 = vmatprep.subr.mxu0 0.0
    %1461 = vmatpush1.msra.mxu0 0.0
    %1462 = vmatprep.subr.mxu0 0.0
    %1463 = vmatpush1.msra.mxu0 0.0
    %1464 = vmatprep.subr.mxu0 0.0
    %1465 = vmatpush1.msra.mxu0 0.0
    %1466 = vmatprep.subr.mxu0 0.0
    %1467 = vmatpush1.msra.mxu0 0.0
    %1468 = vmatprep.subr.mxu0 0.0
    %1469 = vmatpush1.msra.mxu0 0.0
    %1470 = vmatprep.subr.mxu0 0.0
    %1471 = vmatpush1.msra.mxu0 0.0
    %1472 = vmatprep.subr.mxu0 0.0
    %1473 = vmatpush1.msra.mxu0 0.0
    %1474 = vmatprep.subr.mxu0 0.0
    %1475 = vmatpush1.msra.mxu0 0.0
    %1476 = vmatprep.subr.mxu0 0.0
    %1477 = vmatpush1.msra.mxu0 0.0
    %1478 = vmatprep.subr.mxu0 0.0
    %1479 = vmatpush1.msra.mxu0 0.0
    %1480 = vmatprep.subr.mxu0 0.0
    %1481 = vmatpush1.msra.mxu0 0.0
    %1482 = vmatprep.subr.mxu0 0.0
    %1483 = vmatpush1.msra.mxu0 0.0
    %1484 = vmatprep.subr.mxu0 0.0
    %1485 = vmatpush1.msra.mxu0 0.0
    %1486 = vmatprep.subr.mxu0 0.0
    %1487 = vmatpush1.msra.mxu0 0.0
    %1488 = vmatprep.subr.mxu0 0.0
    %1489 = vmatpush1.msra.mxu0 0.0
    %1490 = vmatprep.subr.mxu0 0.0
    %1491 = vmatpush1.msra.mxu0 0.0
    %1492 = vmatprep.mubr.f32.mxu0 0.0
    %1493 = vmatmul.mubr.f32.gmra.mrb[0].mxu0 %v1421
    %v1494 = vpop.f32.mrb[0].mxu0
    %v1495 = vadd.f32 0.0, %v1494
    %v1496 = vpop.f32.mrb[0].mxu0
    %v1497 = vadd.f32 0.0, %v1496
    %1498 = vdwg.mxu0
    %1499 = vmatprep.subr.mxu0 0.0
    %1500 = vmatpush1.msra.mxu0 %v388
    %1501 = vmatprep.subr.mxu0 0.0
    %1502 = vmatpush1.msra.mxu0 %v391
    %1503 = vmatprep.subr.mxu0 0.0
    %1504 = vmatpush1.msra.mxu0 %v394
    %1505 = vmatprep.subr.mxu0 0.0
    %1506 = vmatpush1.msra.mxu0 %v397
    %1507 = vmatprep.subr.mxu0 0.0
    %1508 = vmatpush1.msra.mxu0 %v400
    %1509 = vmatprep.subr.mxu0 0.0
    %1510 = vmatpush1.msra.mxu0 %v403
    %1511 = vmatprep.subr.mxu0 0.0
    %1512 = vmatpush1.msra.mxu0 %v406
    %1513 = vmatprep.subr.mxu0 0.0
    %1514 = vmatpush1.msra.mxu0 %v409
    %1515 = vmatprep.subr.mxu0 0.0
    %1516 = vmatpush1.msra.mxu0 %v412
    %1517 = vmatprep.subr.mxu0 0.0
    %1518 = vmatpush1.msra.mxu0 %v415
    %1519 = vmatprep.subr.mxu0 0.0
    %1520 = vmatpush1.msra.mxu0 %v418
    %1521 = vmatprep.subr.mxu0 0.0
    %1522 = vmatpush1.msra.mxu0 %v421
    %1523 = vmatprep.subr.mxu0 0.0
    %1524 = vmatpush1.msra.mxu0 %v424
    %1525 = vmatprep.subr.mxu0 0.0
    %1526 = vmatpush1.msra.mxu0 %v427
    %1527 = vmatprep.subr.mxu0 0.0
    %1528 = vmatpush1.msra.mxu0 %v430
    %1529 = vmatprep.subr.mxu0 0.0
    %1530 = vmatpush1.msra.mxu0 %v433
    %1531 = vmatprep.subr.mxu0 0.0
    %1532 = vmatpush1.msra.mxu0 0.0
    %1533 = vmatprep.subr.mxu0 0.0
    %1534 = vmatpush1.msra.mxu0 0.0
    %1535 = vmatprep.subr.mxu0 0.0
    %1536 = vmatpush1.msra.mxu0 0.0
    %1537 = vmatprep.subr.mxu0 0.0
    %1538 = vmatpush1.msra.mxu0 0.0
    %1539 = vmatprep.subr.mxu0 0.0
    %1540 = vmatpush1.msra.mxu0 0.0
    %1541 = vmatprep.subr.mxu0 0.0
    %1542 = vmatpush1.msra.mxu0 0.0
    %1543 = vmatprep.subr.mxu0 0.0
    %1544 = vmatpush1.msra.mxu0 0.0
    %1545 = vmatprep.subr.mxu0 0.0
    %1546 = vmatpush1.msra.mxu0 0.0
    %1547 = vmatprep.subr.mxu0 0.0
    %1548 = vmatpush1.msra.mxu0 0.0
    %1549 = vmatprep.subr.mxu0 0.0
    %1550 = vmatpush1.msra.mxu0 0.0
    %1551 = vmatprep.subr.mxu0 0.0
    %1552 = vmatpush1.msra.mxu0 0.0
    %1553 = vmatprep.subr.mxu0 0.0
    %1554 = vmatpush1.msra.mxu0 0.0
    %1555 = vmatprep.subr.mxu0 0.0
    %1556 = vmatpush1.msra.mxu0 0.0
    %1557 = vmatprep.subr.mxu0 0.0
    %1558 = vmatpush1.msra.mxu0 0.0
    %1559 = vmatprep.subr.mxu0 0.0
    %1560 = vmatpush1.msra.mxu0 0.0
    %1561 = vmatprep.subr.mxu0 0.0
    %1562 = vmatpush1.msra.mxu0 0.0
    %1563 = vmatprep.mubr.f32.mxu0 0.0
    %1564 = vmatmul.mubr.f32.gmra.mrb[0].mxu0 %v1421
    %v1565 = vpop.f32.mrb[0].mxu0
    %v1566 = vadd.f32 0.0, %v1565
    %v1567 = vpop.f32.mrb[0].mxu0
    %1568 = vdwg.mxu0
    %v1569 = vadd.f32 %v1425, %v1495
    %v1570 = vmul.f32 %v1569, 0.5
    %v1571 = vtanh.pop %v1570
    %v1572 = vmul.f32 %v1571, 0.5
    %v1573 = vadd.f32 %v1572, 0.5
    %v1574 = vadd.f32 %v1426, %v1497
    %v1575 = vmul.f32 %v1574, 0.5
    %v1576 = vtanh.pop %v1575
    %v1577 = vmul.f32 %v1576, 0.5
    %v1578 = vadd.f32 %v1577, 0.5
    %v1579 = vadd.f32 %v1566, %v439
    %v1580 = vmul.f32 %v1573, %v1579
    %v1581 = vadd.f32 %v1427, %v1580
    %v1582 = vtanh.pop %v1581
    %v1583 = vsub.f32 %v1421, %v1582
    %v1584 = vmul.f32 %v1578, %v1583
    %v1585 = vadd.f32 %v1582, %v1584
    %s1586 = scalar_lea.vmem [#allocation10], 48
    %1587 = vst [vmem:[%s1586] sm:$0xff] %v1585
    %s1588 = scalar_lea.vmem [#allocation2], 168
    %v1589 = vld [vmem:[%s1588] sm:$0xff]
    %v1590 = vld [vmem:[%s1588 + $0x8] sm:$0xff]
    %v1591 = vld [vmem:[%s1588 + $0x10] sm:$0xff]
    %1592 = vmatprep.subr.mxu0 %v387
    %1593 = vmatpush1.msra.mxu0 %v386
    %1594 = vmatprep.subr.mxu0 %v390
    %1595 = vmatpush1.msra.mxu0 %v389
    %1596 = vmatprep.subr.mxu0 %v393
    %1597 = vmatpush1.msra.mxu0 %v392
    %1598 = vmatprep.subr.mxu0 %v396
    %1599 = vmatpush1.msra.mxu0 %v395
    %1600 = vmatprep.subr.mxu0 %v399
    %1601 = vmatpush1.msra.mxu0 %v398
    %1602 = vmatprep.subr.mxu0 %v402
    %1603 = vmatpush1.msra.mxu0 %v401
    %1604 = vmatprep.subr.mxu0 %v405
    %1605 = vmatpush1.msra.mxu0 %v404
    %1606 = vmatprep.subr.mxu0 %v408
    %1607 = vmatpush1.msra.mxu0 %v407
    %1608 = vmatprep.subr.mxu0 %v411
    %1609 = vmatpush1.msra.mxu0 %v410
    %1610 = vmatprep.subr.mxu0 %v414
    %1611 = vmatpush1.msra.mxu0 %v413
    %1612 = vmatprep.subr.mxu0 %v417
    %1613 = vmatpush1.msra.mxu0 %v416
    %1614 = vmatprep.subr.mxu0 %v420
    %1615 = vmatpush1.msra.mxu0 %v419
    %1616 = vmatprep.subr.mxu0 %v423
    %1617 = vmatpush1.msra.mxu0 %v422
    %1618 = vmatprep.subr.mxu0 %v426
    %1619 = vmatpush1.msra.mxu0 %v425
    %1620 = vmatprep.subr.mxu0 %v429
    %1621 = vmatpush1.msra.mxu0 %v428
    %1622 = vmatprep.subr.mxu0 %v432
    %1623 = vmatpush1.msra.mxu0 %v431
    %1624 = vmatprep.subr.mxu0 0.0
    %1625 = vmatpush1.msra.mxu0 0.0
    %1626 = vmatprep.subr.mxu0 0.0
    %1627 = vmatpush1.msra.mxu0 0.0
    %1628 = vmatprep.subr.mxu0 0.0
    %1629 = vmatpush1.msra.mxu0 0.0
    %1630 = vmatprep.subr.mxu0 0.0
    %1631 = vmatpush1.msra.mxu0 0.0
    %1632 = vmatprep.subr.mxu0 0.0
    %1633 = vmatpush1.msra.mxu0 0.0
    %1634 = vmatprep.subr.mxu0 0.0
    %1635 = vmatpush1.msra.mxu0 0.0
    %1636 = vmatprep.subr.mxu0 0.0
    %1637 = vmatpush1.msra.mxu0 0.0
    %1638 = vmatprep.subr.mxu0 0.0
    %1639 = vmatpush1.msra.mxu0 0.0
    %1640 = vmatprep.subr.mxu0 0.0
    %1641 = vmatpush1.msra.mxu0 0.0
    %1642 = vmatprep.subr.mxu0 0.0
    %1643 = vmatpush1.msra.mxu0 0.0
    %1644 = vmatprep.subr.mxu0 0.0
    %1645 = vmatpush1.msra.mxu0 0.0
    %1646 = vmatprep.subr.mxu0 0.0
    %1647 = vmatpush1.msra.mxu0 0.0
    %1648 = vmatprep.subr.mxu0 0.0
    %1649 = vmatpush1.msra.mxu0 0.0
    %1650 = vmatprep.subr.mxu0 0.0
    %1651 = vmatpush1.msra.mxu0 0.0
    %1652 = vmatprep.subr.mxu0 0.0
    %1653 = vmatpush1.msra.mxu0 0.0
    %1654 = vmatprep.subr.mxu0 0.0
    %1655 = vmatpush1.msra.mxu0 0.0
    %1656 = vmatprep.mubr.f32.mxu0 0.0
    %1657 = vmatmul.mubr.f32.gmra.mrb[0].mxu0 %v1585
    %v1658 = vpop.f32.mrb[0].mxu0
    %v1659 = vadd.f32 0.0, %v1658
    %v1660 = vpop.f32.mrb[0].mxu0
    %v1661 = vadd.f32 0.0, %v1660
    %1662 = vdwg.mxu0
    %1663 = vmatprep.subr.mxu0 0.0
    %1664 = vmatpush1.msra.mxu0 %v388
    %1665 = vmatprep.subr.mxu0 0.0
    %1666 = vmatpush1.msra.mxu0 %v391
    %1667 = vmatprep.subr.mxu0 0.0
    %1668 = vmatpush1.msra.mxu0 %v394
    %1669 = vmatprep.subr.mxu0 0.0
    %1670 = vmatpush1.msra.mxu0 %v397
    %1671 = vmatprep.subr.mxu0 0.0
    %1672 = vmatpush1.msra.mxu0 %v400
    %1673 = vmatprep.subr.mxu0 0.0
    %1674 = vmatpush1.msra.mxu0 %v403
    %1675 = vmatprep.subr.mxu0 0.0
    %1676 = vmatpush1.msra.mxu0 %v406
    %1677 = vmatprep.subr.mxu0 0.0
    %1678 = vmatpush1.msra.mxu0 %v409
    %1679 = vmatprep.subr.mxu0 0.0
    %1680 = vmatpush1.msra.mxu0 %v412
    %1681 = vmatprep.subr.mxu0 0.0
    %1682 = vmatpush1.msra.mxu0 %v415
    %1683 = vmatprep.subr.mxu0 0.0
    %1684 = vmatpush1.msra.mxu0 %v418
    %1685 = vmatprep.subr.mxu0 0.0
    %1686 = vmatpush1.msra.mxu0 %v421
    %1687 = vmatprep.subr.mxu0 0.0
    %1688 = vmatpush1.msra.mxu0 %v424
    %1689 = vmatprep.subr.mxu0 0.0
    %1690 = vmatpush1.msra.mxu0 %v427
    %1691 = vmatprep.subr.mxu0 0.0
    %1692 = vmatpush1.msra.mxu0 %v430
    %1693 = vmatprep.subr.mxu0 0.0
    %1694 = vmatpush1.msra.mxu0 %v433
    %1695 = vmatprep.subr.mxu0 0.0
    %1696 = vmatpush1.msra.mxu0 0.0
    %1697 = vmatprep.subr.mxu0 0.0
    %1698 = vmatpush1.msra.mxu0 0.0
    %1699 = vmatprep.subr.mxu0 0.0
    %1700 = vmatpush1.msra.mxu0 0.0
    %1701 = vmatprep.subr.mxu0 0.0
    %1702 = vmatpush1.msra.mxu0 0.0
    %1703 = vmatprep.subr.mxu0 0.0
    %1704 = vmatpush1.msra.mxu0 0.0
    %1705 = vmatprep.subr.mxu0 0.0
    %1706 = vmatpush1.msra.mxu0 0.0
    %1707 = vmatprep.subr.mxu0 0.0
    %1708 = vmatpush1.msra.mxu0 0.0
    %1709 = vmatprep.subr.mxu0 0.0
    %1710 = vmatpush1.msra.mxu0 0.0
    %1711 = vmatprep.subr.mxu0 0.0
    %1712 = vmatpush1.msra.mxu0 0.0
    %1713 = vmatprep.subr.mxu0 0.0
    %1714 = vmatpush1.msra.mxu0 0.0
    %1715 = vmatprep.subr.mxu0 0.0
    %1716 = vmatpush1.msra.mxu0 0.0
    %1717 = vmatprep.subr.mxu0 0.0
    %1718 = vmatpush1.msra.mxu0 0.0
    %1719 = vmatprep.subr.mxu0 0.0
    %1720 = vmatpush1.msra.mxu0 0.0
    %1721 = vmatprep.subr.mxu0 0.0
    %1722 = vmatpush1.msra.mxu0 0.0
    %1723 = vmatprep.subr.mxu0 0.0
    %1724 = vmatpush1.msra.mxu0 0.0
    %1725 = vmatprep.subr.mxu0 0.0
    %1726 = vmatpush1.msra.mxu0 0.0
    %1727 = vmatprep.mubr.f32.mxu0 0.0
    %1728 = vmatmul.mubr.f32.gmra.mrb[0].mxu0 %v1585
    %v1729 = vpop.f32.mrb[0].mxu0
    %v1730 = vadd.f32 0.0, %v1729
    %v1731 = vpop.f32.mrb[0].mxu0
    %1732 = vdwg.mxu0
    %v1733 = vadd.f32 %v1589, %v1659
    %v1734 = vmul.f32 %v1733, 0.5
    %v1735 = vtanh.pop %v1734
    %v1736 = vmul.f32 %v1735, 0.5
    %v1737 = vadd.f32 %v1736, 0.5
    %v1738 = vadd.f32 %v1590, %v1661
    %v1739 = vmul.f32 %v1738, 0.5
    %v1740 = vtanh.pop %v1739
    %v1741 = vmul.f32 %v1740, 0.5
    %v1742 = vadd.f32 %v1741, 0.5
    %v1743 = vadd.f32 %v1730, %v439
    %v1744 = vmul.f32 %v1737, %v1743
    %v1745 = vadd.f32 %v1591, %v1744
    %v1746 = vtanh.pop %v1745
    %v1747 = vsub.f32 %v1585, %v1746
    %v1748 = vmul.f32 %v1742, %v1747
    %v1749 = vadd.f32 %v1746, %v1748
    %s1750 = scalar_lea.vmem [#allocation10], 56
    %1751 = vst [vmem:[%s1750] sm:$0xff] %v1749
    %1752 = vst [vmem:[#allocation3] sm:$0xff] %v1749
    // Predicated region
    $region42: #{tpu_custom_call.1} parent=1 // pred_check
      _
    $region43: #{tpu_custom_call.1} parent=1 // pred_check_branch
      %1754 = sbr.rel (0) target = $region45
    $region44: #{tpu_custom_call.1} parent=1 // pred_region
      %s1756 = ssub.s32 1024, 1024
      %1757 = vsyncadd [#allocation6], %s1756
      %s1758 = sshll.u32 [#allocation10], 4
      %s1759 = int_to_ptr.vmem [resolvable:$true] %s1758
      %1764 = dma.vmem_to_hbm [thread:$0]  %s1759, 1024, %s6, [#allocation6], 128, 128, 8
    $region45: #{tpu_custom_call.1} parent=1 // pred_fallthru
      _
    // Predicated region
    $region46: #{tpu_custom_call.1} parent=1 // pred_check
      _
    $region47: #{tpu_custom_call.1} parent=1 // pred_check_branch
      %1766 = sbr.rel (0) target = $region49
    $region48: #{tpu_custom_call.1} parent=1 // pred_region
      %1767 = dma.done [#allocation6], 1024
    $region49: #{tpu_custom_call.1} parent=1 // pred_fallthru
      _
    %1768 = vsyncpa [#allocation5], 1
    %1769 = vsyncpa [#allocation8], 1
    %1770 = vsyncpa [#allocation6], 1

</llo_original>
